<compile_context>
chip_gen: v7x
topology: tpu7x:2x2x1
jax: 0.10.0
libtpu: 0.0.40
codegen_flags: <defaults>
</compile_context>

<pallas_src>
import functools

import jax
import jax.numpy as jnp
from jax import lax
from jax.experimental import pallas as pl
from jax.experimental.pallas import tpu as pltpu


def _round_up(x, m):
    return (x + m - 1) // m * m


def _cdiv(a, b):
    return (a + b - 1) // b


def _vmem_cap_bytes():
    """~3/4 of physical VMEM (96 MiB on v5e/v6e, 48 MiB on v7x); safe fallback."""
    phys = 64 << 20
    try:
        info = pltpu.get_tpu_info()
        phys = int(getattr(info, "vmem_capacity_bytes", phys)) or phys
    except Exception:
        pass
    return max(min(phys * 3 // 4, 100 << 20), 16 << 20)


def _vmem_tile_bytes(tm, tn, H, c_bytes, o_bytes):
    """Conservative working-set estimate: assumes every streamed operand is
    double-buffered (covers the fallback path where W1/b1/gamma/beta are not
    Buffered(1)), plus the resident hn scratch."""
    x_t = 2 * tm * H * c_bytes
    w1_t = 2 * H * H * c_bytes
    w2_t = 2 * H * tn * c_bytes
    out_t = 2 * tm * tn * o_bytes
    hn_t = tm * H * c_bytes
    vec_t = 2 * 8 * (3 * H + tn) * 4          # b1, gamma, beta, b2 (f32, sublane-padded)
    return x_t + w1_t + w2_t + out_t + hn_t + vec_t


def _exam_head_kernel(x_ref, w1_ref, b1_ref, gamma_ref, beta_ref,
                      w2_ref, b2_ref, o_ref, hn_ref, *, eps):
    # --- phase 1: dense -> relu -> LayerNorm, once per row tile (vocab step 0) ---
    @pl.when(pl.program_id(1) == 0)
    def _():
        h = jnp.dot(x_ref[...], w1_ref[...],
                    preferred_element_type=jnp.float32)
        h = h + b1_ref[...].astype(jnp.float32)
        h = jnp.maximum(h, 0.0)                           # relu
        # two-pass LayerNorm statistics in f32 over the hidden axis.
        mean = jnp.mean(h, axis=-1, keepdims=True)
        c = h - mean
        var = jnp.mean(c * c, axis=-1, keepdims=True)
        hn = c * lax.rsqrt(var + eps)
        hn = (hn * gamma_ref[...].astype(jnp.float32)
              + beta_ref[...].astype(jnp.float32))
        hn_ref[...] = hn.astype(hn_ref.dtype)             # resident across j

    # --- phase 2: decoder matmul for this vocab tile (lane-dense store) ---
    logits = jnp.dot(hn_ref[...], w2_ref[...],
                     preferred_element_type=jnp.float32)
    logits = logits + b2_ref[...].astype(jnp.float32)
    o_ref[...] = logits.astype(o_ref.dtype)


def _choose_tn(V):
    v_lane = _round_up(V, 128)
    return v_lane if v_lane <= 1024 else 1024


def prepare_params(params, *, compute_dtype=jnp.bfloat16, tn=None):
    """One-time parameter prep: cast matmul operands to the MXU streaming dtype
    (bf16 by default; f32 accumulation / LN stats are kept in-kernel) and pad
    the decoder weight/bias to the vocab tile. Removes all HBM-level copies of
    W2 from the per-call path."""
    w1, b1, gamma, beta, w2, b2 = (params[k] for k in
                                   ("w1", "b1", "gamma", "beta", "w2", "b2"))
    V = w2.shape[1]
    if tn is None:
        tn = _choose_tn(V)
    tn = min(_round_up(tn, 128), _round_up(V, 128))
    V_pad = _round_up(V, tn)
    if V_pad != V:
        w2 = jnp.pad(w2, ((0, 0), (0, V_pad - V)))
        b2 = jnp.pad(b2, ((0, 0), (0, V_pad - V)))
    if compute_dtype is not None:
        w1 = w1.astype(compute_dtype)
        w2 = w2.astype(compute_dtype)
    # b1 / gamma / beta / b2 stay in their original (f32) dtype: they are only
    # used in the f32 epilogues, so keeping them wide is free and more precise.
    return dict(w1=w1, b1=b1, gamma=gamma, beta=beta, w2=w2, b2=b2,
                tn=int(tn), vocab_size=int(V), compute_dtype=w1.dtype)


def _choose_tm(M):
    if M <= 8:
        return 8
    if M <= 1024:
        # >= 2 row tiles so a 2-TensorCore chip (v7x) can split the row axis.
        return _round_up(_cdiv(M, 2), 8)
    # Large M: 512-row tiles keep the decoder phase at/near compute-bound in
    # bf16 on v7x and close to it on v6e while W2 is re-streamed once per tile.
    return 512


def exam_prediction_head(x, params, *, eps=1e-5, tm=None):
    """x: (..., H) float array. Returns logits of shape (..., V).
    `params` should come from prepare_params(); a raw init_params() dict is
    accepted (slow path: the one-time prep then happens per call)."""
    if "tn" not in params:
        params = prepare_params(params, compute_dtype=None)
    w1, b1, gamma, beta, w2, b2 = (params[k] for k in
                                   ("w1", "b1", "gamma", "beta", "w2", "b2"))
    tn = params["tn"]
    V = params["vocab_size"]
    cdt = jnp.dtype(params["compute_dtype"])

    H = x.shape[-1]
    lead = x.shape[:-1]
    out_dtype = x.dtype
    V_pad = w2.shape[1]

    x2 = x.reshape(-1, H).astype(cdt)
    M = x2.shape[0]

    cap = _vmem_cap_bytes()
    c_bytes = cdt.itemsize
    o_bytes = jnp.dtype(out_dtype).itemsize

    if tm is None:
        tm = _choose_tm(M)
    tm = max(_round_up(min(tm, _round_up(M, 8)), 8), 8)

    # Fit the working set into the VMEM budget: shrink tn (down to 512) first,
    # then tm.  W2 is pre-padded to a multiple of tn, so only halvings that
    # still divide V_pad are taken.
    while (tn > 512 and V_pad % (tn // 2) == 0
           and _vmem_tile_bytes(tm, tn, H, c_bytes, o_bytes) > cap):
        tn //= 2
    while tm > 8 and _vmem_tile_bytes(tm, tn, H, c_bytes, o_bytes) > cap:
        tm = max(_round_up(tm // 2, 8), 8)

    need = _vmem_tile_bytes(tm, tn, H, c_bytes, o_bytes)
    vmem_limit = int(min(cap, max(need + (need >> 2) + (2 << 20), 16 << 20)))

    grid = (_cdiv(M, tm), V_pad // tn)
    kernel = functools.partial(_exam_head_kernel, eps=eps)

    def call(single_buffer_consts):
        if single_buffer_consts:
            def const_spec(shape):
                return pl.BlockSpec(shape, lambda i, j: (0, 0),
                                    pipeline_mode=pl.Buffered(1))
        else:
            def const_spec(shape):
                return pl.BlockSpec(shape, lambda i, j: (0, 0))
        in_specs = [
            pl.BlockSpec((tm, H), lambda i, j: (i, 0)),    # x row tile
            const_spec((H, H)),                            # W1 (pre-transposed)
            const_spec((1, H)),                            # b1
            const_spec((1, H)),                            # LN gamma
            const_spec((1, H)),                            # LN beta
            pl.BlockSpec((H, tn), lambda i, j: (0, j)),    # W2 vocab tile
            pl.BlockSpec((1, tn), lambda i, j: (0, j)),    # decoder bias tile
        ]
        return pl.pallas_call(
            kernel,
            out_shape=jax.ShapeDtypeStruct((M, V_pad), out_dtype),
            grid_spec=pltpu.PrefetchScalarGridSpec(
                num_scalar_prefetch=0,
                grid=grid,
                in_specs=in_specs,
                out_specs=pl.BlockSpec((tm, tn), lambda i, j: (i, j)),
                scratch_shapes=[pltpu.VMEM((tm, H), cdt)],  # resident hn
            ),
            compiler_params=pltpu.CompilerParams(
                dimension_semantics=("parallel", "arbitrary"),
                vmem_limit_bytes=vmem_limit),
        )(x2, w1, b1, gamma, beta, w2, b2)

    try:
        out = call(True)                 # W1/b1/gamma/beta single-buffered
    except Exception:                    # older jax: no BlockSpec pipeline_mode
        out = call(False)

    return out[:, :V].reshape(*lead, V)


def init_params(key, hidden_size, vocab_size, dtype=jnp.float32):
    """Deterministic synthetic init matching the module's parameter shapes."""
    k1, k2, k3 = jax.random.split(key, 3)
    bound1 = 1.0 / jnp.sqrt(hidden_size)
    # nn.Linear(hidden, hidden): weight (H, H), bias (H,) -> store W^T (H, H)
    w1 = jax.random.uniform(k1, (hidden_size, hidden_size), dtype, -bound1, bound1)
    b1 = jax.random.uniform(k2, (1, hidden_size), dtype, -bound1, bound1)
    # nn.LayerNorm(hidden): gamma = ones, beta = zeros
    gamma = jnp.ones((1, hidden_size), dtype)
    beta = jnp.zeros((1, hidden_size), dtype)
    # decoder nn.Linear(hidden, vocab, bias=False): weight (V, H) -> store W^T (H, V)
    w2 = jax.random.uniform(k3, (hidden_size, vocab_size), dtype, -bound1, bound1)
    # self.bias = zeros(vocab)
    b2 = jnp.zeros((1, vocab_size), dtype)
    return dict(w1=w1, b1=b1, gamma=gamma, beta=beta, w2=w2, b2=b2)


def _reference(x, params, eps=1e-5):
    # pure-JAX reference of the PyTorch forward
    h = x @ params["w1"] + params["b1"][0]
    h = jnp.maximum(h, 0.0)
    mean = jnp.mean(h, axis=-1, keepdims=True)
    var = jnp.mean((h - mean) ** 2, axis=-1, keepdims=True)
    hn = (h - mean) / jnp.sqrt(var + eps)
    hn = hn * params["gamma"][0] + params["beta"][0]
    return hn @ params["w2"] + params["b2"][0]


if __name__ == "__main__":
    key = jax.random.PRNGKey(0)

    # --- Test 1: module-like shapes, f32 streaming path, tight tolerance ---
    batch, seq, hidden, vocab = 2, 8, 256, 105
    k1, k2, key = jax.random.split(key, 3)
    x = jax.random.normal(k1, (batch, seq, hidden), jnp.float32)
    raw = init_params(k2, hidden, vocab)
    ref = _reference(x, raw)

    p_f32 = prepare_params(raw, compute_dtype=jnp.float32)
    out = jax.block_until_ready(exam_prediction_head(x, p_f32))
    assert out.shape == (batch, seq, vocab), out.shape
    assert jnp.allclose(out, ref, atol=2e-3, rtol=2e-3), \
        float(jnp.max(jnp.abs(out - ref)))

    # --- Test 2: default bf16 weight/activation streaming (weights cast once) ---
    p_bf16 = prepare_params(raw)                     # compute_dtype defaults to bf16
    out_b = jax.block_until_ready(exam_prediction_head(x, p_bf16))
    assert out_b.shape == (batch, seq, vocab), out_b.shape
    assert bool(jnp.isfinite(out_b).all())
    assert float(jnp.max(jnp.abs(out_b - ref))) < 0.25   # loose bf16 tolerance

    # --- Test 3: multi-tile grid (rows x vocab) exercising hn-scratch reuse ---
    batch2, seq2, vocab2 = 2, 24, 300
    k3, k4, key = jax.random.split(key, 3)
    x2 = jax.random.normal(k3, (batch2, seq2, hidden), jnp.float32)
    raw2 = init_params(k4, hidden, vocab2)
    p2 = prepare_params(raw2, compute_dtype=jnp.float32, tn=128)
    out2 = jax.block_until_ready(exam_prediction_head(x2, p2, tm=16))  # grid (3, 3)
    ref2 = _reference(x2, raw2)
    assert out2.shape == (batch2, seq2, vocab2), out2.shape
    assert jnp.allclose(out2, ref2, atol=2e-3, rtol=2e-3), \
        float(jnp.max(jnp.abs(out2 - ref2)))

    # --- Test 4: ragged row count (no x padding; Pallas edge blocks + masked store) ---
    x_r = x2.reshape(-1, hidden)[:20]                # M=20 -> tm=16, last tile partial
    out_r = jax.block_until_ready(exam_prediction_head(x_r, p2))
    ref_r = ref2.reshape(-1, vocab2)[:20]
    assert out_r.shape == (20, vocab2), out_r.shape
    assert jnp.allclose(out_r, ref_r, atol=2e-3, rtol=2e-3), \
        float(jnp.max(jnp.abs(out_r - ref_r)))

    print("KERNEL_OK")
</pallas_src>

<mosaic_0001>
module attributes {stable_mosaic.version = 11 : i64} {
  func.func @_exam_head_kernel(%arg0: i32, %arg1: i32, %arg2: memref<8x256xf32, #tpu.memory_space<vmem>>, %arg3: memref<256x256xf32, #tpu.memory_space<vmem>>, %arg4: memref<1x256xf32, #tpu.memory_space<vmem>>, %arg5: memref<1x256xf32, #tpu.memory_space<vmem>>, %arg6: memref<1x256xf32, #tpu.memory_space<vmem>>, %arg7: memref<256x128xf32, #tpu.memory_space<vmem>>, %arg8: memref<1x128xf32, #tpu.memory_space<vmem>>, %arg9: memref<8x128xf32, #tpu.memory_space<vmem>>, %arg10: memref<8x256xf32, #tpu.memory_space<vmem>>) attributes {dimension_semantics = [#tpu.dimension_semantics<parallel>, #tpu.dimension_semantics<arbitrary>], iteration_bounds = array<i64: 2, 1>, scalar_prefetch = 0 : i64, scratch_operands = 1 : i64, tpu.core_type = #tpu.core_type<tc>, window_params = [{transform_indices = @transform_0, window_bounds = array<i64: 8, 256>}, {pipeline_mode = #tpu.pipeline_mode<synchronous>, transform_indices = @transform_1, window_bounds = array<i64: 256, 256>}, {pipeline_mode = #tpu.pipeline_mode<synchronous>, transform_indices = @transform_2, window_bounds = array<i64: 1, 256>}, {pipeline_mode = #tpu.pipeline_mode<synchronous>, transform_indices = @transform_3, window_bounds = array<i64: 1, 256>}, {pipeline_mode = #tpu.pipeline_mode<synchronous>, transform_indices = @transform_4, window_bounds = array<i64: 1, 256>}, {transform_indices = @transform_5, window_bounds = array<i64: 256, 128>}, {transform_indices = @transform_6, window_bounds = array<i64: 1, 128>}, {transform_indices = @transform_7, window_bounds = array<i64: 8, 128>}]} {
    %c0_i32 = arith.constant 0 : i32
    %0 = arith.cmpi eq, %arg1, %c0_i32 : i32
    %1 = arith.extui %0 : i1 to i32
    %c0_i32_0 = arith.constant 0 : i32
    %2 = arith.cmpi ne, %1, %c0_i32_0 : i32
    scf.if %2 {
      %c0_8 = arith.constant 0 : index
      %c0_9 = arith.constant 0 : index
      %10 = vector.load %arg2[%c0_8, %c0_9] : memref<8x256xf32, #tpu.memory_space<vmem>>, vector<8x256xf32>
      %c0_10 = arith.constant 0 : index
      %c0_11 = arith.constant 0 : index
      %11 = vector.load %arg3[%c0_10, %c0_11] : memref<256x256xf32, #tpu.memory_space<vmem>>, vector<256x256xf32>
      %cst_12 = arith.constant dense<0.000000e+00> : vector<8x256xf32>
      %12 = tpu.matmul %10, %11, %cst_12 {dimension_numbers = #tpu.dot_dimension_numbers<[1], [0], [0], [1], [0, 0, 1, 1], [], []>} : vector<8x256xf32>, vector<256x256xf32>, vector<8x256xf32> -> vector<8x256xf32>
      %c0_13 = arith.constant 0 : index
      %c0_14 = arith.constant 0 : index
      %13 = vector.load %arg4[%c0_13, %c0_14] : memref<1x256xf32, #tpu.memory_space<vmem>>, vector<1x256xf32>
      %14 = vector.broadcast %13 : vector<1x256xf32> to vector<8x256xf32>
      %15 = arith.addf %12, %14 : vector<8x256xf32>
      %cst_15 = arith.constant 0.000000e+00 : f32
      %16 = vector.broadcast %cst_15 : f32 to vector<8x256xf32>
      %17 = arith.maximumf %15, %16 : vector<8x256xf32>
      %cst_16 = arith.constant dense<0.000000e+00> : vector<8xf32>
      %18 = vector.multi_reduction <add>, %17, %cst_16 [1] : vector<8x256xf32> to vector<8xf32>
      %19 = vector.shape_cast %18 : vector<8xf32> to vector<8x1xf32>
      %cst_17 = arith.constant 2.560000e+02 : f32
      %20 = vector.broadcast %cst_17 : f32 to vector<8x1xf32>
      %21 = arith.divf %19, %20 : vector<8x1xf32>
      %22 = vector.broadcast %21 : vector<8x1xf32> to vector<8x256xf32>
      %23 = arith.subf %17, %22 : vector<8x256xf32>
      %24 = arith.mulf %23, %23 : vector<8x256xf32>
      %cst_18 = arith.constant dense<0.000000e+00> : vector<8xf32>
      %25 = vector.multi_reduction <add>, %24, %cst_18 [1] : vector<8x256xf32> to vector<8xf32>
      %26 = vector.shape_cast %25 : vector<8xf32> to vector<8x1xf32>
      %cst_19 = arith.constant 2.560000e+02 : f32
      %27 = vector.broadcast %cst_19 : f32 to vector<8x1xf32>
      %28 = arith.divf %26, %27 : vector<8x1xf32>
      %cst_20 = arith.constant 9.99999974E-6 : f32
      %29 = vector.broadcast %cst_20 : f32 to vector<8x1xf32>
      %30 = arith.addf %28, %29 : vector<8x1xf32>
      %31 = math.rsqrt %30 : vector<8x1xf32>
      %32 = vector.broadcast %31 : vector<8x1xf32> to vector<8x256xf32>
      %33 = arith.mulf %23, %32 : vector<8x256xf32>
      %c0_21 = arith.constant 0 : index
      %c0_22 = arith.constant 0 : index
      %34 = vector.load %arg5[%c0_21, %c0_22] : memref<1x256xf32, #tpu.memory_space<vmem>>, vector<1x256xf32>
      %35 = vector.broadcast %34 : vector<1x256xf32> to vector<8x256xf32>
      %36 = arith.mulf %33, %35 : vector<8x256xf32>
      %c0_23 = arith.constant 0 : index
      %c0_24 = arith.constant 0 : index
      %37 = vector.load %arg6[%c0_23, %c0_24] : memref<1x256xf32, #tpu.memory_space<vmem>>, vector<1x256xf32>
      %38 = vector.broadcast %37 : vector<1x256xf32> to vector<8x256xf32>
      %39 = arith.addf %36, %38 : vector<8x256xf32>
      %c0_25 = arith.constant 0 : index
      %c0_26 = arith.constant 0 : index
      %40 = vector.load %arg10[%c0_25, %c0_26] : memref<8x256xf32, #tpu.memory_space<vmem>>, vector<8x256xf32>
      tpu.vector_store %arg10[%c0_25, %c0_26], %39 {strides = array<i32>} : memref<8x256xf32, #tpu.memory_space<vmem>>, vector<8x256xf32>,
    } else {
    }
    %c0 = arith.constant 0 : index
    %c0_1 = arith.constant 0 : index
    %3 = vector.load %arg10[%c0, %c0_1] : memref<8x256xf32, #tpu.memory_space<vmem>>, vector<8x256xf32>
    %c0_2 = arith.constant 0 : index
    %c0_3 = arith.constant 0 : index
    %4 = vector.load %arg7[%c0_2, %c0_3] : memref<256x128xf32, #tpu.memory_space<vmem>>, vector<256x128xf32>
    %cst = arith.constant dense<0.000000e+00> : vector<8x128xf32>
    %5 = tpu.matmul %3, %4, %cst {dimension_numbers = #tpu.dot_dimension_numbers<[1], [0], [0], [1], [0, 0, 1, 1], [], []>} : vector<8x256xf32>, vector<256x128xf32>, vector<8x128xf32> -> vector<8x128xf32>
    %c0_4 = arith.constant 0 : index
    %c0_5 = arith.constant 0 : index
    %6 = vector.load %arg8[%c0_4, %c0_5] : memref<1x128xf32, #tpu.memory_space<vmem>>, vector<1x128xf32>
    %7 = vector.broadcast %6 : vector<1x128xf32> to vector<8x128xf32>
    %8 = arith.addf %5, %7 : vector<8x128xf32>
    %c0_6 = arith.constant 0 : index
    %c0_7 = arith.constant 0 : index
    %9 = vector.load %arg9[%c0_6, %c0_7] : memref<8x128xf32, #tpu.memory_space<vmem>>, vector<8x128xf32>
    tpu.vector_store %arg9[%c0_6, %c0_7], %8 {strides = array<i32>} : memref<8x128xf32, #tpu.memory_space<vmem>>, vector<8x128xf32>,
    return
  }
  func.func @transform_0(%arg0: i32, %arg1: i32) -> (i32, i32) {
    %c0_i32 = arith.constant 0 : i32
    %c0_i32_0 = arith.constant 0 : i32
    return %arg0, %c0_i32 : i32, i32
  }
  func.func @transform_1(%arg0: i32, %arg1: i32) -> (i32, i32) {
    %c0_i32 = arith.constant 0 : i32
    %c0_i32_0 = arith.constant 0 : i32
    %c0_i32_1 = arith.constant 0 : i32
    return %c0_i32, %c0_i32_0 : i32, i32
  }
  func.func @transform_2(%arg0: i32, %arg1: i32) -> (i32, i32) {
    %c0_i32 = arith.constant 0 : i32
    %c0_i32_0 = arith.constant 0 : i32
    %c0_i32_1 = arith.constant 0 : i32
    return %c0_i32, %c0_i32_0 : i32, i32
  }
  func.func @transform_3(%arg0: i32, %arg1: i32) -> (i32, i32) {
    %c0_i32 = arith.constant 0 : i32
    %c0_i32_0 = arith.constant 0 : i32
    %c0_i32_1 = arith.constant 0 : i32
    return %c0_i32, %c0_i32_0 : i32, i32
  }
  func.func @transform_4(%arg0: i32, %arg1: i32) -> (i32, i32) {
    %c0_i32 = arith.constant 0 : i32
    %c0_i32_0 = arith.constant 0 : i32
    %c0_i32_1 = arith.constant 0 : i32
    return %c0_i32, %c0_i32_0 : i32, i32
  }
  func.func @transform_5(%arg0: i32, %arg1: i32) -> (i32, i32) {
    %c0_i32 = arith.constant 0 : i32
    %c0_i32_0 = arith.constant 0 : i32
    return %c0_i32, %arg1 : i32, i32
  }
  func.func @transform_6(%arg0: i32, %arg1: i32) -> (i32, i32) {
    %c0_i32 = arith.constant 0 : i32
    %c0_i32_0 = arith.constant 0 : i32
    return %c0_i32, %arg1 : i32, i32
  }
  func.func @transform_7(%arg0: i32, %arg1: i32) -> (i32, i32) {
    %c0_i32 = arith.constant 0 : i32
    return %arg0, %arg1 : i32, i32
  }
}

module attributes {stable_mosaic.version = 11 : i64} {
  func.func @_exam_head_kernel(%arg0: i32, %arg1: i32, %arg2: memref<8x256xf32, #tpu.memory_space<vmem>>, %arg3: memref<256x256xf32, #tpu.memory_space<vmem>>, %arg4: memref<1x256xf32, #tpu.memory_space<vmem>>, %arg5: memref<1x256xf32, #tpu.memory_space<vmem>>, %arg6: memref<1x256xf32, #tpu.memory_space<vmem>>, %arg7: memref<256x128xf32, #tpu.memory_space<vmem>>, %arg8: memref<1x128xf32, #tpu.memory_space<vmem>>, %arg9: memref<8x128xf32, #tpu.memory_space<vmem>>, %arg10: memref<8x256xf32, #tpu.memory_space<vmem>>) attributes {dimension_semantics = [#tpu.dimension_semantics<parallel>, #tpu.dimension_semantics<arbitrary>], iteration_bounds = array<i64: 2, 1>, scalar_prefetch = 0 : i64, scratch_operands = 1 : i64, tpu.core_type = #tpu.core_type<tc>, window_params = [{transform_indices = @transform_0, window_bounds = array<i64: 8, 256>}, {pipeline_mode = #tpu.pipeline_mode<synchronous>, transform_indices = @transform_1, window_bounds = array<i64: 256, 256>}, {pipeline_mode = #tpu.pipeline_mode<synchronous>, transform_indices = @transform_2, window_bounds = array<i64: 1, 256>}, {pipeline_mode = #tpu.pipeline_mode<synchronous>, transform_indices = @transform_3, window_bounds = array<i64: 1, 256>}, {pipeline_mode = #tpu.pipeline_mode<synchronous>, transform_indices = @transform_4, window_bounds = array<i64: 1, 256>}, {transform_indices = @transform_5, window_bounds = array<i64: 256, 128>}, {transform_indices = @transform_6, window_bounds = array<i64: 1, 128>}, {transform_indices = @transform_7, window_bounds = array<i64: 8, 128>}]} {
    %c0_i32 = arith.constant 0 : i32
    %0 = arith.cmpi eq, %arg1, %c0_i32 : i32
    %1 = arith.extui %0 : i1 to i32
    %c0_i32_0 = arith.constant 0 : i32
    %2 = arith.cmpi ne, %1, %c0_i32_0 : i32
    scf.if %2 {
      %c0_8 = arith.constant 0 : index
      %c0_9 = arith.constant 0 : index
      %10 = vector.load %arg2[%c0_8, %c0_9] : memref<8x256xf32, #tpu.memory_space<vmem>>, vector<8x256xf32>
      %c0_10 = arith.constant 0 : index
      %c0_11 = arith.constant 0 : index
      %11 = vector.load %arg3[%c0_10, %c0_11] : memref<256x256xf32, #tpu.memory_space<vmem>>, vector<256x256xf32>
      %cst_12 = arith.constant dense<0.000000e+00> : vector<8x256xf32>
      %12 = tpu.matmul %10, %11, %cst_12 {dimension_numbers = #tpu.dot_dimension_numbers<[1], [0], [0], [1], [0, 0, 1, 1], [], []>} : vector<8x256xf32>, vector<256x256xf32>, vector<8x256xf32> -> vector<8x256xf32>
      %c0_13 = arith.constant 0 : index
      %c0_14 = arith.constant 0 : index
      %13 = vector.load %arg4[%c0_13, %c0_14] : memref<1x256xf32, #tpu.memory_space<vmem>>, vector<1x256xf32>
      %14 = vector.broadcast %13 : vector<1x256xf32> to vector<8x256xf32>
      %15 = arith.addf %12, %14 : vector<8x256xf32>
      %cst_15 = arith.constant 0.000000e+00 : f32
      %16 = vector.broadcast %cst_15 : f32 to vector<8x256xf32>
      %17 = arith.maximumf %15, %16 : vector<8x256xf32>
      %cst_16 = arith.constant dense<0.000000e+00> : vector<8xf32>
      %18 = vector.multi_reduction <add>, %17, %cst_16 [1] : vector<8x256xf32> to vector<8xf32>
      %19 = vector.shape_cast %18 : vector<8xf32> to vector<8x1xf32>
      %cst_17 = arith.constant 2.560000e+02 : f32
      %20 = vector.broadcast %cst_17 : f32 to vector<8x1xf32>
      %21 = arith.divf %19, %20 : vector<8x1xf32>
      %22 = vector.broadcast %21 : vector<8x1xf32> to vector<8x256xf32>
      %23 = arith.subf %17, %22 : vector<8x256xf32>
      %24 = arith.mulf %23, %23 : vector<8x256xf32>
      %cst_18 = arith.constant dense<0.000000e+00> : vector<8xf32>
      %25 = vector.multi_reduction <add>, %24, %cst_18 [1] : vector<8x256xf32> to vector<8xf32>
      %26 = vector.shape_cast %25 : vector<8xf32> to vector<8x1xf32>
      %cst_19 = arith.constant 2.560000e+02 : f32
      %27 = vector.broadcast %cst_19 : f32 to vector<8x1xf32>
      %28 = arith.divf %26, %27 : vector<8x1xf32>
      %cst_20 = arith.constant 9.99999974E-6 : f32
      %29 = vector.broadcast %cst_20 : f32 to vector<8x1xf32>
      %30 = arith.addf %28, %29 : vector<8x1xf32>
      %31 = math.rsqrt %30 : vector<8x1xf32>
      %32 = vector.broadcast %31 : vector<8x1xf32> to vector<8x256xf32>
      %33 = arith.mulf %23, %32 : vector<8x256xf32>
      %c0_21 = arith.constant 0 : index
      %c0_22 = arith.constant 0 : index
      %34 = vector.load %arg5[%c0_21, %c0_22] : memref<1x256xf32, #tpu.memory_space<vmem>>, vector<1x256xf32>
      %35 = vector.broadcast %34 : vector<1x256xf32> to vector<8x256xf32>
      %36 = arith.mulf %33, %35 : vector<8x256xf32>
      %c0_23 = arith.constant 0 : index
      %c0_24 = arith.constant 0 : index
      %37 = vector.load %arg6[%c0_23, %c0_24] : memref<1x256xf32, #tpu.memory_space<vmem>>, vector<1x256xf32>
      %38 = vector.broadcast %37 : vector<1x256xf32> to vector<8x256xf32>
      %39 = arith.addf %36, %38 : vector<8x256xf32>
      %c0_25 = arith.constant 0 : index
      %c0_26 = arith.constant 0 : index
      %40 = vector.load %arg10[%c0_25, %c0_26] : memref<8x256xf32, #tpu.memory_space<vmem>>, vector<8x256xf32>
      tpu.vector_store %arg10[%c0_25, %c0_26], %39 {strides = array<i32>} : memref<8x256xf32, #tpu.memory_space<vmem>>, vector<8x256xf32>,
    } else {
    }
    %c0 = arith.constant 0 : index
    %c0_1 = arith.constant 0 : index
    %3 = vector.load %arg10[%c0, %c0_1] : memref<8x256xf32, #tpu.memory_space<vmem>>, vector<8x256xf32>
    %c0_2 = arith.constant 0 : index
    %c0_3 = arith.constant 0 : index
    %4 = vector.load %arg7[%c0_2, %c0_3] : memref<256x128xf32, #tpu.memory_space<vmem>>, vector<256x128xf32>
    %cst = arith.constant dense<0.000000e+00> : vector<8x128xf32>
    %5 = tpu.matmul %3, %4, %cst {dimension_numbers = #tpu.dot_dimension_numbers<[1], [0], [0], [1], [0, 0, 1, 1], [], []>} : vector<8x256xf32>, vector<256x128xf32>, vector<8x128xf32> -> vector<8x128xf32>
    %c0_4 = arith.constant 0 : index
    %c0_5 = arith.constant 0 : index
    %6 = vector.load %arg8[%c0_4, %c0_5] : memref<1x128xf32, #tpu.memory_space<vmem>>, vector<1x128xf32>
    %7 = vector.broadcast %6 : vector<1x128xf32> to vector<8x128xf32>
    %8 = arith.addf %5, %7 : vector<8x128xf32>
    %c0_6 = arith.constant 0 : index
    %c0_7 = arith.constant 0 : index
    %9 = vector.load %arg9[%c0_6, %c0_7] : memref<8x128xf32, #tpu.memory_space<vmem>>, vector<8x128xf32>
    tpu.vector_store %arg9[%c0_6, %c0_7], %8 {strides = array<i32>} : memref<8x128xf32, #tpu.memory_space<vmem>>, vector<8x128xf32>,
    return
  }
  func.func @transform_0(%arg0: i32, %arg1: i32) -> (i32, i32) {
    %c0_i32 = arith.constant 0 : i32
    %c0_i32_0 = arith.constant 0 : i32
    return %arg0, %c0_i32 : i32, i32
  }
  func.func @transform_1(%arg0: i32, %arg1: i32) -> (i32, i32) {
    %c0_i32 = arith.constant 0 : i32
    %c0_i32_0 = arith.constant 0 : i32
    %c0_i32_1 = arith.constant 0 : i32
    return %c0_i32, %c0_i32_0 : i32, i32
  }
  func.func @transform_2(%arg0: i32, %arg1: i32) -> (i32, i32) {
    %c0_i32 = arith.constant 0 : i32
    %c0_i32_0 = arith.constant 0 : i32
    %c0_i32_1 = arith.constant 0 : i32
    return %c0_i32, %c0_i32_0 : i32, i32
  }
  func.func @transform_3(%arg0: i32, %arg1: i32) -> (i32, i32) {
    %c0_i32 = arith.constant 0 : i32
    %c0_i32_0 = arith.constant 0 : i32
    %c0_i32_1 = arith.constant 0 : i32
    return %c0_i32, %c0_i32_0 : i32, i32
  }
  func.func @transform_4(%arg0: i32, %arg1: i32) -> (i32, i32) {
    %c0_i32 = arith.constant 0 : i32
    %c0_i32_0 = arith.constant 0 : i32
    %c0_i32_1 = arith.constant 0 : i32
    return %c0_i32, %c0_i32_0 : i32, i32
  }
  func.func @transform_5(%arg0: i32, %arg1: i32) -> (i32, i32) {
    %c0_i32 = arith.constant 0 : i32
    %c0_i32_0 = arith.constant 0 : i32
    return %c0_i32, %arg1 : i32, i32
  }
  func.func @transform_6(%arg0: i32, %arg1: i32) -> (i32, i32) {
    %c0_i32 = arith.constant 0 : i32
    %c0_i32_0 = arith.constant 0 : i32
    return %c0_i32, %arg1 : i32, i32
  }
  func.func @transform_7(%arg0: i32, %arg1: i32) -> (i32, i32) {
    %c0_i32 = arith.constant 0 : i32
    return %arg0, %arg1 : i32, i32
  }
}

</mosaic_0001>

<llo_original>
// kernel: tpu_custom_call.1
$region0: #{tpu_custom_call.1}
  #allocation0 [shape = 'u32[]', space=smem, size = 0x4, offset = 0x4, fixed_abs, tag = 'smem constant byte address 0x4 - core index']
  #allocation1 [shape = 'u32[144,128]{1,0:T(1,128)}', space=vmem, size = 0x12000, scoped, tag = 'internal scratch']
  #allocation2 [shape = 'f32[8,256]{1,0:T(8,128)}', space=vmem, size = 0x2000, scoped, tag = 'scratch operand']
  %s0 = inlined_call_operand.hbm [shape: f32[16,256], index: 0, kind: input, shape index: {}]
  %s1 = inlined_call_operand.hbm [shape: f32[256,256], index: 1, kind: input, shape index: {}]
  %s2 = inlined_call_operand.vmem [shape: f32[1,256], index: 2, kind: input, shape index: {}]
  %s3 = inlined_call_operand.vmem [shape: f32[1,256], index: 3, kind: input, shape index: {}]
  %s4 = inlined_call_operand.vmem [shape: f32[1,256], index: 4, kind: input, shape index: {}]
  %s5 = inlined_call_operand.hbm [shape: f32[256,128], index: 5, kind: input, shape index: {}]
  %s6 = inlined_call_operand.vmem [shape: f32[1,128], index: 6, kind: input, shape index: {}]
  %s7 = inlined_call_operand.hbm [shape: f32[16,128], index: 7, kind: output, shape index: {}]
  %s8 = sld [smem:[#allocation0]]
  $region77: #{tpu_custom_call.1} parent=0
    _
  %s10 = ssub.s32 1, %s8
  %s11 = scalar_select 0, %s10, %s8
  $region1: #{tpu_custom_call.1} parent=0
    #allocation3 [shape = 'u8[16384]{0}', space=vmem, size = 0x4000, scoped, tag = 'input window, operand 0']
    #allocation4 [shape = 's32[2]{0}', space=sflag, size = 0x8, scoped, tag = 'scoped memory for tpu_custom_call.1']
    #allocation5 [shape = 's32[2]{0}', space=sflag, size = 0x8, scoped, tag = 'scoped memory for tpu_custom_call.1']
    #allocation6 [shape = 'u8[262144]{0}', space=vmem, size = 0x40000, scoped, tag = 'input window, operand 1, single buffered']
    #allocation7 [shape = 's32[1]{0}', space=sflag, size = 0x4, scoped, tag = 'scoped memory for tpu_custom_call.1']
    #allocation8 [shape = 'u8[131072]{0}', space=vmem, size = 0x20000, scoped, tag = 'input window, operand 5, single buffered']
    #allocation9 [shape = 'u8[8192]{0}', space=vmem, size = 0x2000, scoped, tag = 'output window, operand 0']
    %12 = vsyncpa [#allocation4], 0
    %s13 = scalar_lea.sflag [#allocation4], 1
    %14 = vsyncpa %s13, 0
    %15 = vsyncpa [#allocation7], 0
    %16 = vsyncpa [#allocation5], 0
    %s17 = scalar_lea.sflag [#allocation5], 1
    %18 = vsyncpa %s17, 0
    loop: start=0, step=1, limit=4
    $region2: #{tpu_custom_call.1} parent=1 // loop_pre_header
      _
    $region3: #{tpu_custom_call.1} parent=1 // loop_header
      %s20 = sphi 0, %s24
      %p21 = scmp.ge.s32.totalorder %s20, 4
      %s27 = sphi 0, %s39
      %s28 = sphi 0, %s35
      %s29 = sphi 0, %s27
      %s30 = sphi 0, %s28
      %s31 = sphi 0, %s29
      %s32 = sphi 0, %s30
      %s42 = sphi 0, %s44
      %s45 = sphi 0, %s42
      %s46 = sphi 0, %s45
      %s62 = sphi 0, %s46
      %s66 = sphi 0, %s66
      %s68 = sphi 0, %s66
      %s69 = sphi 0, %s68
      %s83 = sphi 0, %s69
      %s87 = sphi 0, %s87
      %s89 = sphi 0, %s87
      %s90 = sphi 0, %s89
      %s104 = sphi 0, %s90
      %s108 = sphi 0, %s108
      %s110 = sphi 0, %s108
      %s111 = sphi 0, %s110
      %s125 = sphi 0, %s111
      %s129 = sphi 0, %s129
      %s131 = sphi 0, %s129
      %s132 = sphi 0, %s131
      %s146 = sphi 0, %s132
      %s152 = sphi 0, %s154
      %s155 = sphi 0, %s152
      %s156 = sphi 0, %s155
      %s172 = sphi 0, %s156
      %s178 = sphi 0, %s180
      %s181 = sphi 0, %s178
      %s182 = sphi 0, %s181
      %s198 = sphi 0, %s182
      %s206 = sphi 0, %s208
      %s209 = sphi 0, %s206
      %s210 = sphi 0, %s209
      %s226 = sphi 0, %s210
    $region4: #{tpu_custom_call.1} parent=1 // loop_header_branch
      %23 = sbr.rel (%p21) target = $region8
    $region5: #{tpu_custom_call.1} parent=1 // loop_body
      %s25 = ssub.s32 %s20, 1
      %s26 = ssub.s32 %s20, 2
      %s33 = sadd.s32 1, %s28
      %p34 = scmp.ge.s32.totalorder %s33, 1
      %s35 = scalar_select %p34, 0, %s33
      %s36 = sadd.s32 1, %s27
      %s37 = scalar_select %p34, %s36, %s27
      %p38 = scmp.ge.s32.totalorder %s37, 2
      %s39 = scalar_select %p38, 0, %s37
      %s40 = ssub.s32 %s27, %s39
      %p41 = scmp.eq.s32.totalorder %s40, 0
      %s43 = sadd.s32 %s42, 1
      %s44 = scalar_select %p41, %s42, %s43
      %p47 = pneg %p41
      %p48 = scmp.eq.s32.totalorder %s20, 1
      %p49 = por %p47, %p48
      %p50 = scmp.ne.s32.totalorder %s42, %s45
      %p51 = scmp.eq.s32.totalorder %s20, 0
      %p52 = por %p50, %p51
      %p53 = scmp.ne.s32.totalorder %s42, %s45
      %p54 = scmp.eq.s32.totalorder %s25, 1
      %p55 = por %p53, %p54
      %p56 = scmp.ne.s32.totalorder %s45, %s46
      %p57 = scmp.eq.s32.totalorder %s25, 0
      %p58 = por %p56, %p57
      %p59 = scmp.ne.s32.totalorder %s45, %s46
      %p60 = scmp.eq.s32.totalorder %s26, 1
      %p61 = por %p59, %p60
      %p63 = scmp.ne.s32.totalorder %s46, %s62
      %p64 = scmp.eq.s32.totalorder %s26, 0
      %p65 = por %p63, %p64
      %s67 = sadd.s32 %s66, 1
      %p70 = scmp.eq.s32.totalorder %s20, 1
      %p71 = scmp.ne.s32.totalorder %s66, %s68
      %p72 = scmp.eq.s32.totalorder %s20, 0
      %p73 = por %p71, %p72
      %p74 = scmp.ne.s32.totalorder %s66, %s68
      %p75 = scmp.eq.s32.totalorder %s25, 1
      %p76 = por %p74, %p75
      %p77 = scmp.ne.s32.totalorder %s68, %s69
      %p78 = scmp.eq.s32.totalorder %s25, 0
      %p79 = por %p77, %p78
      %p80 = scmp.ne.s32.totalorder %s68, %s69
      %p81 = scmp.eq.s32.totalorder %s26, 1
      %p82 = por %p80, %p81
      %p84 = scmp.ne.s32.totalorder %s69, %s83
      %p85 = scmp.eq.s32.totalorder %s26, 0
      %p86 = por %p84, %p85
      %s88 = sadd.s32 %s87, 1
      %p91 = scmp.eq.s32.totalorder %s20, 1
      %p92 = scmp.ne.s32.totalorder %s87, %s89
      %p93 = scmp.eq.s32.totalorder %s20, 0
      %p94 = por %p92, %p93
      %p95 = scmp.ne.s32.totalorder %s87, %s89
      %p96 = scmp.eq.s32.totalorder %s25, 1
      %p97 = por %p95, %p96
      %p98 = scmp.ne.s32.totalorder %s89, %s90
      %p99 = scmp.eq.s32.totalorder %s25, 0
      %p100 = por %p98, %p99
      %p101 = scmp.ne.s32.totalorder %s89, %s90
      %p102 = scmp.eq.s32.totalorder %s26, 1
      %p103 = por %p101, %p102
      %p105 = scmp.ne.s32.totalorder %s90, %s104
      %p106 = scmp.eq.s32.totalorder %s26, 0
      %p107 = por %p105, %p106
      %s109 = sadd.s32 %s108, 1
      %p112 = scmp.eq.s32.totalorder %s20, 1
      %p113 = scmp.ne.s32.totalorder %s108, %s110
      %p114 = scmp.eq.s32.totalorder %s20, 0
      %p115 = por %p113, %p114
      %p116 = scmp.ne.s32.totalorder %s108, %s110
      %p117 = scmp.eq.s32.totalorder %s25, 1
      %p118 = por %p116, %p117
      %p119 = scmp.ne.s32.totalorder %s110, %s111
      %p120 = scmp.eq.s32.totalorder %s25, 0
      %p121 = por %p119, %p120
      %p122 = scmp.ne.s32.totalorder %s110, %s111
      %p123 = scmp.eq.s32.totalorder %s26, 1
      %p124 = por %p122, %p123
      %p126 = scmp.ne.s32.totalorder %s111, %s125
      %p127 = scmp.eq.s32.totalorder %s26, 0
      %p128 = por %p126, %p127
      %s130 = sadd.s32 %s129, 1
      %p133 = scmp.eq.s32.totalorder %s20, 1
      %p134 = scmp.ne.s32.totalorder %s129, %s131
      %p135 = scmp.eq.s32.totalorder %s20, 0
      %p136 = por %p134, %p135
      %p137 = scmp.ne.s32.totalorder %s129, %s131
      %p138 = scmp.eq.s32.totalorder %s25, 1
      %p139 = por %p137, %p138
      %p140 = scmp.ne.s32.totalorder %s131, %s132
      %p141 = scmp.eq.s32.totalorder %s25, 0
      %p142 = por %p140, %p141
      %p143 = scmp.ne.s32.totalorder %s131, %s132
      %p144 = scmp.eq.s32.totalorder %s26, 1
      %p145 = por %p143, %p144
      %p147 = scmp.ne.s32.totalorder %s132, %s146
      %p148 = scmp.eq.s32.totalorder %s26, 0
      %p149 = por %p147, %p148
      %s150 = ssub.s32 %s28, %s35
      %p151 = scmp.eq.s32.totalorder %s150, 0
      %s153 = sadd.s32 %s152, 1
      %s154 = scalar_select %p151, %s152, %s153
      %p157 = pneg %p151
      %p158 = scmp.eq.s32.totalorder %s20, 1
      %p159 = por %p157, %p158
      %p160 = scmp.ne.s32.totalorder %s152, %s155
      %p161 = scmp.eq.s32.totalorder %s20, 0
      %p162 = por %p160, %p161
      %p163 = scmp.ne.s32.totalorder %s152, %s155
      %p164 = scmp.eq.s32.totalorder %s25, 1
      %p165 = por %p163, %p164
      %p166 = scmp.ne.s32.totalorder %s155, %s156
      %p167 = scmp.eq.s32.totalorder %s25, 0
      %p168 = por %p166, %p167
      %p169 = scmp.ne.s32.totalorder %s155, %s156
      %p170 = scmp.eq.s32.totalorder %s26, 1
      %p171 = por %p169, %p170
      %p173 = scmp.ne.s32.totalorder %s156, %s172
      %p174 = scmp.eq.s32.totalorder %s26, 0
      %p175 = por %p173, %p174
      %s176 = ssub.s32 %s28, %s35
      %p177 = scmp.eq.s32.totalorder %s176, 0
      %s179 = sadd.s32 %s178, 1
      %s180 = scalar_select %p177, %s178, %s179
      %p183 = pneg %p177
      %p184 = scmp.eq.s32.totalorder %s20, 1
      %p185 = por %p183, %p184
      %p186 = scmp.ne.s32.totalorder %s178, %s181
      %p187 = scmp.eq.s32.totalorder %s20, 0
      %p188 = por %p186, %p187
      %p189 = scmp.ne.s32.totalorder %s178, %s181
      %p190 = scmp.eq.s32.totalorder %s25, 1
      %p191 = por %p189, %p190
      %p192 = scmp.ne.s32.totalorder %s181, %s182
      %p193 = scmp.eq.s32.totalorder %s25, 0
      %p194 = por %p192, %p193
      %p195 = scmp.ne.s32.totalorder %s181, %s182
      %p196 = scmp.eq.s32.totalorder %s26, 1
      %p197 = por %p195, %p196
      %p199 = scmp.ne.s32.totalorder %s182, %s198
      %p200 = scmp.eq.s32.totalorder %s26, 0
      %p201 = por %p199, %p200
      %s202 = ssub.s32 %s27, %s39
      %s203 = ssub.s32 %s28, %s35
      %s204 = sor.u32 %s202, %s203
      %p205 = scmp.eq.s32.totalorder %s204, 0
      %s207 = sadd.s32 %s206, 1
      %s208 = scalar_select %p205, %s206, %s207
      %p211 = pneg %p205
      %p212 = scmp.eq.s32.totalorder %s20, 1
      %p213 = por %p211, %p212
      %p214 = scmp.ne.s32.totalorder %s206, %s209
      %p215 = scmp.eq.s32.totalorder %s20, 0
      %p216 = por %p214, %p215
      %p217 = scmp.ne.s32.totalorder %s206, %s209
      %p218 = scmp.eq.s32.totalorder %s25, 1
      %p219 = por %p217, %p218
      %p220 = scmp.ne.s32.totalorder %s209, %s210
      %p221 = scmp.eq.s32.totalorder %s25, 0
      %p222 = por %p220, %p221
      %p223 = scmp.ne.s32.totalorder %s209, %s210
      %p224 = scmp.eq.s32.totalorder %s26, 1
      %p225 = por %p223, %p224
      %p227 = scmp.ne.s32.totalorder %s210, %s226
      %p228 = scmp.eq.s32.totalorder %s26, 0
      %p229 = por %p227, %p228
      %p230 = scmp.le.s32.totalorder 1, %s20
      %p231 = scmp.lt.s32.totalorder %s20, 3
      %p232 = pnand %p230, %p231
      %p233 = pneg %p232
      // Predicated region
      $region9: #{tpu_custom_call.1} parent=5 // pred_check
        _
      $region10: #{tpu_custom_call.1} parent=5 // pred_check_branch
        %235 = sbr.rel (%p232) target = $region12
      $region11: #{tpu_custom_call.1} parent=5 // pred_region
        %s236 = ssub.s32 %s20, 1
        // Predicated region
        $region13: #{tpu_custom_call.1} parent=11 // pred_check
          %p237 = pneg %p79
        $region14: #{tpu_custom_call.1} parent=11 // pred_check_branch
          %239 = sbr.rel (%p237) target = $region16
        $region15: #{tpu_custom_call.1} parent=11 // pred_region
          %s241 = ssub.s32 8192, 8192
          %242 = vsyncadd [#allocation7], %s241
          %s243 = sshll.u32 [#allocation6], 4
          %s244 = int_to_ptr.vmem [resolvable:$true] %s243
          %249 = dma.hbm_to_vmem [thread:$0]  %s1, 8192, %s244, [#allocation7], 256, 256, 16
        $region16: #{tpu_custom_call.1} parent=11 // pred_fallthru
          _
        // Predicated region
        $region17: #{tpu_custom_call.1} parent=11 // pred_check
          %p250 = pneg %p100
        $region18: #{tpu_custom_call.1} parent=11 // pred_check_branch
          %252 = sbr.rel (%p250) target = $region20
        $region19: #{tpu_custom_call.1} parent=11 // pred_region
          _
        $region20: #{tpu_custom_call.1} parent=11 // pred_fallthru
          _
        // Predicated region
        $region21: #{tpu_custom_call.1} parent=11 // pred_check
          %p253 = pneg %p121
        $region22: #{tpu_custom_call.1} parent=11 // pred_check_branch
          %255 = sbr.rel (%p253) target = $region24
        $region23: #{tpu_custom_call.1} parent=11 // pred_region
          _
        $region24: #{tpu_custom_call.1} parent=11 // pred_fallthru
          _
        // Predicated region
        $region25: #{tpu_custom_call.1} parent=11 // pred_check
          %p256 = pneg %p142
        $region26: #{tpu_custom_call.1} parent=11 // pred_check_branch
          %258 = sbr.rel (%p256) target = $region28
        $region27: #{tpu_custom_call.1} parent=11 // pred_region
          _
        $region28: #{tpu_custom_call.1} parent=11 // pred_fallthru
          _
        // Predicated region
        $region29: #{tpu_custom_call.1} parent=11 // pred_check
          %p259 = pneg %p168
        $region30: #{tpu_custom_call.1} parent=11 // pred_check_branch
          %261 = sbr.rel (%p259) target = $region32
        $region31: #{tpu_custom_call.1} parent=11 // pred_region
          %s263 = ssub.s32 4096, 4096
          %264 = vsyncadd [#allocation7], %s263
          %s265 = smul.addr %s30, 128
          %s266 = scalar_lea.hbm %s5, %s265
          %s267 = sshll.u32 [#allocation8], 4
          %s268 = int_to_ptr.vmem [resolvable:$true] %s267
          %273 = dma.hbm_to_vmem [thread:$0]  %s266, 4096, %s268, [#allocation7], 128, 128, 8
        $region32: #{tpu_custom_call.1} parent=11 // pred_fallthru
          _
        // Predicated region
        $region33: #{tpu_custom_call.1} parent=11 // pred_check
          %p274 = pneg %p194
        $region34: #{tpu_custom_call.1} parent=11 // pred_check_branch
          %276 = sbr.rel (%p274) target = $region36
        $region35: #{tpu_custom_call.1} parent=11 // pred_region
          %p277 = scmp.lt.s32.totalorder %s30, 0
          %s278 = scalar_select %p277, %s30, 0
          %s279 = scalar_lea.vmem %s6, %s278
        $region36: #{tpu_custom_call.1} parent=11 // pred_fallthru
          _
      $region12: #{tpu_custom_call.1} parent=5 // pred_fallthru
        _
      %p280 = scmp.lt.s32.totalorder %s20, 2
      // Predicated region
      $region37: #{tpu_custom_call.1} parent=5 // pred_check
        %p281 = pneg %p280
      $region38: #{tpu_custom_call.1} parent=5 // pred_check_branch
        %283 = sbr.rel (%p281) target = $region40
      $region39: #{tpu_custom_call.1} parent=5 // pred_region
        // Predicated region
        $region41: #{tpu_custom_call.1} parent=39 // pred_check
          %p284 = pneg %p52
        $region42: #{tpu_custom_call.1} parent=39 // pred_check_branch
          %286 = sbr.rel (%p284) target = $region44
        $region43: #{tpu_custom_call.1} parent=39 // pred_region
          %s287 = sand.u32 %s42, 1
          %s288 = scalar_lea.sflag [#allocation4], %s287
          %s289 = sand.u32 %s42, 1
          %s290 = smul.addr %s289, 16
          %s291 = scalar_lea.vmem [#allocation3], %s290
          %s293 = ssub.s32 256, 256
          %294 = vsyncadd %s288, %s293
          %s295 = smul.addr %s27, 2
          %s296 = smul.addr %s295, 128
          %s297 = scalar_lea.hbm %s0, %s296
          %s299 = sshll.u32 %s291, 4
          %s300 = int_to_ptr.vmem [resolvable:$true] %s299
          %302 = dma.hbm_to_vmem [thread:$0]  %s297, 256, %s300, %s288
        $region44: #{tpu_custom_call.1} parent=39 // pred_fallthru
          _
      $region40: #{tpu_custom_call.1} parent=5 // pred_fallthru
        _
      %p303 = scmp.le.s32.totalorder 1, %s20
      %p304 = scmp.lt.s32.totalorder %s20, 3
      %p305 = pnand %p303, %p304
      %p306 = pneg %p305
      // Predicated region
      $region45: #{tpu_custom_call.1} parent=5 // pred_check
        _
      $region46: #{tpu_custom_call.1} parent=5 // pred_check_branch
        %308 = sbr.rel (%p305) target = $region48
      $region47: #{tpu_custom_call.1} parent=5 // pred_region
        %s309 = ssub.s32 %s20, 1
        %s310 = sand.u32 %s45, 1
        %s311 = scalar_lea.sflag [#allocation4], %s310
        %s312 = sand.u32 %s45, 1
        %s313 = smul.addr %s312, 16
        %s314 = scalar_lea.vmem [#allocation3], %s313
        // Predicated region
        $region49: #{tpu_custom_call.1} parent=47 // pred_check
          %p315 = pneg %p58
        $region50: #{tpu_custom_call.1} parent=47 // pred_check_branch
          %317 = sbr.rel (%p315) target = $region52
        $region51: #{tpu_custom_call.1} parent=47 // pred_region
          %318 = dma.done %s311, 256
        $region52: #{tpu_custom_call.1} parent=47 // pred_fallthru
          _
        // Predicated region
        $region53: #{tpu_custom_call.1} parent=47 // pred_check
          %p319 = pneg %p79
        $region54: #{tpu_custom_call.1} parent=47 // pred_check_branch
          %321 = sbr.rel (%p319) target = $region56
        $region55: #{tpu_custom_call.1} parent=47 // pred_region
          %322 = dma.done [#allocation7], 8192
        $region56: #{tpu_custom_call.1} parent=47 // pred_fallthru
          _
        // Predicated region
        $region57: #{tpu_custom_call.1} parent=47 // pred_check
          %p323 = pneg %p168
        $region58: #{tpu_custom_call.1} parent=47 // pred_check_branch
          %325 = sbr.rel (%p323) target = $region60
        $region59: #{tpu_custom_call.1} parent=47 // pred_region
          %326 = dma.done [#allocation7], 4096
        $region60: #{tpu_custom_call.1} parent=47 // pred_fallthru
          _
        %s327 = sand.u32 %s45, 1
        %s328 = scalar_lea.sflag [#allocation4], %s327
        %s329 = sand.u32 %s45, 1
        %s330 = smul.addr %s329, 16
        %s331 = scalar_lea.vmem [#allocation3], %s330
        %p332 = pneg %p58
        %p333 = pneg %p55
        %p334 = pneg %p79
        %p335 = pneg %p76
        %p336 = pneg %p100
        %p337 = pneg %p97
        %p338 = pneg %p121
        %p339 = pneg %p118
        %p340 = pneg %p142
        %p341 = pneg %p139
        %p342 = pneg %p168
        %p343 = pneg %p165
        %p344 = scmp.lt.s32.totalorder %s30, 0
        %s345 = scalar_select %p344, %s30, 0
        %s346 = scalar_lea.vmem %s6, %s345
        %p347 = pneg %p194
        %p348 = pneg %p191
        %p349 = pneg %p222
        %p350 = pneg %p219
        %s351 = sand.u32 %s209, 1
        %s352 = scalar_lea.sflag [#allocation5], %s351
        %s353 = sand.u32 %s209, 1
        %s354 = smul.addr %s353, 8
        %s355 = scalar_lea.vmem [#allocation9], %s354
        %p356 = scmp.lt.s32.totalorder %s30, 0
        %s357 = scalar_select %p356, %s30, 0
        %s358 = scalar_lea.vmem %s6, %s357
        %p359 = scmp.eq.s32.totalorder %s30, 0
        // Predicated region
        $region61: #{tpu_custom_call.1} parent=47 // pred_check
          %p360 = pneg %p359
        $region62: #{tpu_custom_call.1} parent=47 // pred_check_branch
          %362 = sbr.rel (%p360) target = $region64
        $region63: #{tpu_custom_call.1} parent=47 // pred_region
          %v363 = vld [vmem:[%s314] sm:$0xff]
          %v364 = vld [vmem:[%s314 + $0x8] sm:$0xff]
          %v365 = vld [vmem:[#allocation6] sm:$0xff]
          %v366 = vld [vmem:[#allocation6 + $0x8] sm:$0xff]
          %v367 = vld [vmem:[#allocation6 + $0x10] sm:$0xff]
          %v368 = vld [vmem:[#allocation6 + $0x18] sm:$0xff]
          %v369 = vld [vmem:[#allocation6 + $0x20] sm:$0xff]
          %v370 = vld [vmem:[#allocation6 + $0x28] sm:$0xff]
          %v371 = vld [vmem:[#allocation6 + $0x30] sm:$0xff]
          %v372 = vld [vmem:[#allocation6 + $0x38] sm:$0xff]
          %v373 = vld [vmem:[#allocation6 + $0x40] sm:$0xff]
          %v374 = vld [vmem:[#allocation6 + $0x48] sm:$0xff]
          %v375 = vld [vmem:[#allocation6 + $0x50] sm:$0xff]
          %v376 = vld [vmem:[#allocation6 + $0x58] sm:$0xff]
          %v377 = vld [vmem:[#allocation6 + $0x60] sm:$0xff]
          %v378 = vld [vmem:[#allocation6 + $0x68] sm:$0xff]
          %v379 = vld [vmem:[#allocation6 + $0x70] sm:$0xff]
          %v380 = vld [vmem:[#allocation6 + $0x78] sm:$0xff]
          %v381 = vld [vmem:[#allocation6 + $0x80] sm:$0xff]
          %v382 = vld [vmem:[#allocation6 + $0x88] sm:$0xff]
          %v383 = vld [vmem:[#allocation6 + $0x90] sm:$0xff]
          %v384 = vld [vmem:[#allocation6 + $0x98] sm:$0xff]
          %v385 = vld [vmem:[#allocation6 + $0xa0] sm:$0xff]
          %v386 = vld [vmem:[#allocation6 + $0xa8] sm:$0xff]
          %v387 = vld [vmem:[#allocation6 + $0xb0] sm:$0xff]
          %v388 = vld [vmem:[#allocation6 + $0xb8] sm:$0xff]
          %v389 = vld [vmem:[#allocation6 + $0xc0] sm:$0xff]
          %v390 = vld [vmem:[#allocation6 + $0xc8] sm:$0xff]
          %v391 = vld [vmem:[#allocation6 + $0xd0] sm:$0xff]
          %v392 = vld [vmem:[#allocation6 + $0xd8] sm:$0xff]
          %v393 = vld [vmem:[#allocation6 + $0xe0] sm:$0xff]
          %v394 = vld [vmem:[#allocation6 + $0xe8] sm:$0xff]
          %v395 = vld [vmem:[#allocation6 + $0xf0] sm:$0xff]
          %v396 = vld [vmem:[#allocation6 + $0xf8] sm:$0xff]
          %v397 = vld [vmem:[#allocation6 + $0x100] sm:$0xff]
          %v398 = vld [vmem:[#allocation6 + $0x108] sm:$0xff]
          %v399 = vld [vmem:[#allocation6 + $0x110] sm:$0xff]
          %v400 = vld [vmem:[#allocation6 + $0x118] sm:$0xff]
          %v401 = vld [vmem:[#allocation6 + $0x120] sm:$0xff]
          %v402 = vld [vmem:[#allocation6 + $0x128] sm:$0xff]
          %v403 = vld [vmem:[#allocation6 + $0x130] sm:$0xff]
          %v404 = vld [vmem:[#allocation6 + $0x138] sm:$0xff]
          %v405 = vld [vmem:[#allocation6 + $0x140] sm:$0xff]
          %v406 = vld [vmem:[#allocation6 + $0x148] sm:$0xff]
          %v407 = vld [vmem:[#allocation6 + $0x150] sm:$0xff]
          %v408 = vld [vmem:[#allocation6 + $0x158] sm:$0xff]
          %v409 = vld [vmem:[#allocation6 + $0x160] sm:$0xff]
          %v410 = vld [vmem:[#allocation6 + $0x168] sm:$0xff]
          %v411 = vld [vmem:[#allocation6 + $0x170] sm:$0xff]
          %v412 = vld [vmem:[#allocation6 + $0x178] sm:$0xff]
          %v413 = vld [vmem:[#allocation6 + $0x180] sm:$0xff]
          %v414 = vld [vmem:[#allocation6 + $0x188] sm:$0xff]
          %v415 = vld [vmem:[#allocation6 + $0x190] sm:$0xff]
          %v416 = vld [vmem:[#allocation6 + $0x198] sm:$0xff]
          %v417 = vld [vmem:[#allocation6 + $0x1a0] sm:$0xff]
          %v418 = vld [vmem:[#allocation6 + $0x1a8] sm:$0xff]
          %v419 = vld [vmem:[#allocation6 + $0x1b0] sm:$0xff]
          %v420 = vld [vmem:[#allocation6 + $0x1b8] sm:$0xff]
          %v421 = vld [vmem:[#allocation6 + $0x1c0] sm:$0xff]
          %v422 = vld [vmem:[#allocation6 + $0x1c8] sm:$0xff]
          %v423 = vld [vmem:[#allocation6 + $0x1d0] sm:$0xff]
          %v424 = vld [vmem:[#allocation6 + $0x1d8] sm:$0xff]
          %v425 = vld [vmem:[#allocation6 + $0x1e0] sm:$0xff]
          %v426 = vld [vmem:[#allocation6 + $0x1e8] sm:$0xff]
          %v427 = vld [vmem:[#allocation6 + $0x1f0] sm:$0xff]
          %v428 = vld [vmem:[#allocation6 + $0x1f8] sm:$0xff]
          %v429 = vld [vmem:[%s2] sm:$0x3]
          %v431 = vlaneseq
          %v432 = vshrl.u32 %v431, 7
          %v433 = vsub.s32 0, %v432
          %v434 = vrot.slane %v429, %v433
          %v435 = vlaneseq
          %v436 = vshrl.u32 %v435, 7
          %v437 = vsub.s32 1, %v436
          %v438 = vrot.slane %v429, %v437
          %441 = vmatprep.subr.mxu0 %v366
          %442 = vmatpush1.msra.mxu0 %v365
          %443 = vmatprep.subr.mxu0 %v368
          %444 = vmatpush1.msra.mxu0 %v367
          %445 = vmatprep.subr.mxu0 %v370
          %446 = vmatpush1.msra.mxu0 %v369
          %447 = vmatprep.subr.mxu0 %v372
          %448 = vmatpush1.msra.mxu0 %v371
          %449 = vmatprep.subr.mxu0 %v374
          %450 = vmatpush1.msra.mxu0 %v373
          %451 = vmatprep.subr.mxu0 %v376
          %452 = vmatpush1.msra.mxu0 %v375
          %453 = vmatprep.subr.mxu0 %v378
          %454 = vmatpush1.msra.mxu0 %v377
          %455 = vmatprep.subr.mxu0 %v380
          %456 = vmatpush1.msra.mxu0 %v379
          %457 = vmatprep.subr.mxu0 %v382
          %458 = vmatpush1.msra.mxu0 %v381
          %459 = vmatprep.subr.mxu0 %v384
          %460 = vmatpush1.msra.mxu0 %v383
          %461 = vmatprep.subr.mxu0 %v386
          %462 = vmatpush1.msra.mxu0 %v385
          %463 = vmatprep.subr.mxu0 %v388
          %464 = vmatpush1.msra.mxu0 %v387
          %465 = vmatprep.subr.mxu0 %v390
          %466 = vmatpush1.msra.mxu0 %v389
          %467 = vmatprep.subr.mxu0 %v392
          %468 = vmatpush1.msra.mxu0 %v391
          %469 = vmatprep.subr.mxu0 %v394
          %470 = vmatpush1.msra.mxu0 %v393
          %471 = vmatprep.subr.mxu0 %v396
          %472 = vmatpush1.msra.mxu0 %v395
          %473 = vmatprep.subr.mxu0 %v398
          %474 = vmatpush1.msra.mxu0 %v397
          %475 = vmatprep.subr.mxu0 %v400
          %476 = vmatpush1.msra.mxu0 %v399
          %477 = vmatprep.subr.mxu0 %v402
          %478 = vmatpush1.msra.mxu0 %v401
          %479 = vmatprep.subr.mxu0 %v404
          %480 = vmatpush1.msra.mxu0 %v403
          %481 = vmatprep.subr.mxu0 %v406
          %482 = vmatpush1.msra.mxu0 %v405
          %483 = vmatprep.subr.mxu0 %v408
          %484 = vmatpush1.msra.mxu0 %v407
          %485 = vmatprep.subr.mxu0 %v410
          %486 = vmatpush1.msra.mxu0 %v409
          %487 = vmatprep.subr.mxu0 %v412
          %488 = vmatpush1.msra.mxu0 %v411
          %489 = vmatprep.subr.mxu0 %v414
          %490 = vmatpush1.msra.mxu0 %v413
          %491 = vmatprep.subr.mxu0 %v416
          %492 = vmatpush1.msra.mxu0 %v415
          %493 = vmatprep.subr.mxu0 %v418
          %494 = vmatpush1.msra.mxu0 %v417
          %495 = vmatprep.subr.mxu0 %v420
          %496 = vmatpush1.msra.mxu0 %v419
          %497 = vmatprep.subr.mxu0 %v422
          %498 = vmatpush1.msra.mxu0 %v421
          %499 = vmatprep.subr.mxu0 %v424
          %500 = vmatpush1.msra.mxu0 %v423
          %501 = vmatprep.subr.mxu0 %v426
          %502 = vmatpush1.msra.mxu0 %v425
          %503 = vmatprep.subr.mxu0 %v428
          %504 = vmatpush1.msra.mxu0 %v427
          %505 = vmatprep.mubr.f32.mxu0 %v364
          %506 = vmatmul.mubr.f32.gmra.mrb[0].mxu0 %v363
          %v507 = vpop.f32.mrb[0].mxu0
          %v508 = vadd.f32 %v434, %v507
          %v509 = vpop.f32.mrb[0].mxu0
          %v510 = vadd.f32 %v438, %v509
          %511 = vdwg.mxu0
          %v512 = vmax.f32 %v508, 0.0
          %v513 = vmax.f32 %v510, 0.0
          %v514 = vadd.f32 %v512, %v513
          %515 = vadd.xlane.f32.xlu0 %v514
          %v516 = vpop.xlane.xlu0 %515
          %v517 = vrcp.pop 256.0
          %v518 = vmul.f32 %v516, %v517
          %v519 = vsub.f32 %v512, %v518
          %v520 = vsub.f32 %v513, %v518
          %v521 = vmul.f32 %v519, %v519
          %v522 = vmul.f32 %v520, %v520
          %v523 = vadd.f32 %v521, %v522
          %524 = vadd.xlane.f32.xlu0 %v523
          %v525 = vpop.xlane.xlu0 %524
          %v526 = vmul.f32 %v525, %v517
          %v527 = vadd.f32 %v526, 1e-05
          %v528 = vrsqrt.pop %v527
          %v529 = vmul.f32 %v519, %v528
          %v530 = vmul.f32 %v520, %v528
          %v531 = vld [vmem:[%s3] sm:$0x3]
          %v533 = vlaneseq
          %v534 = vshrl.u32 %v533, 7
          %v535 = vsub.s32 0, %v534
          %v536 = vrot.slane %v531, %v535
          %v537 = vlaneseq
          %v538 = vshrl.u32 %v537, 7
          %v539 = vsub.s32 1, %v538
          %v540 = vrot.slane %v531, %v539
          %v543 = vmul.f32 %v529, %v536
          %v544 = vmul.f32 %v530, %v540
          %v545 = vld [vmem:[%s4] sm:$0x3]
          %v547 = vlaneseq
          %v548 = vshrl.u32 %v547, 7
          %v549 = vsub.s32 0, %v548
          %v550 = vrot.slane %v545, %v549
          %v551 = vlaneseq
          %v552 = vshrl.u32 %v551, 7
          %v553 = vsub.s32 1, %v552
          %v554 = vrot.slane %v545, %v553
          %v557 = vadd.f32 %v543, %v550
          %v558 = vadd.f32 %v544, %v554
          %559 = vst [vmem:[#allocation2] sm:$0xff] %v557
          %560 = vst [vmem:[#allocation2 + $0x8] sm:$0xff] %v558
        $region64: #{tpu_custom_call.1} parent=47 // pred_fallthru
          _
        %v561 = vld [vmem:[#allocation2] sm:$0xff]
        %v562 = vld [vmem:[#allocation2 + $0x8] sm:$0xff]
        %v563 = vld [vmem:[#allocation8] sm:$0xff]
        %v564 = vld [vmem:[#allocation8 + $0x8] sm:$0xff]
        %v565 = vld [vmem:[#allocation8 + $0x10] sm:$0xff]
        %v566 = vld [vmem:[#allocation8 + $0x18] sm:$0xff]
        %v567 = vld [vmem:[#allocation8 + $0x20] sm:$0xff]
        %v568 = vld [vmem:[#allocation8 + $0x28] sm:$0xff]
        %v569 = vld [vmem:[#allocation8 + $0x30] sm:$0xff]
        %v570 = vld [vmem:[#allocation8 + $0x38] sm:$0xff]
        %v571 = vld [vmem:[#allocation8 + $0x40] sm:$0xff]
        %v572 = vld [vmem:[#allocation8 + $0x48] sm:$0xff]
        %v573 = vld [vmem:[#allocation8 + $0x50] sm:$0xff]
        %v574 = vld [vmem:[#allocation8 + $0x58] sm:$0xff]
        %v575 = vld [vmem:[#allocation8 + $0x60] sm:$0xff]
        %v576 = vld [vmem:[#allocation8 + $0x68] sm:$0xff]
        %v577 = vld [vmem:[#allocation8 + $0x70] sm:$0xff]
        %v578 = vld [vmem:[#allocation8 + $0x78] sm:$0xff]
        %v579 = vld [vmem:[#allocation8 + $0x80] sm:$0xff]
        %v580 = vld [vmem:[#allocation8 + $0x88] sm:$0xff]
        %v581 = vld [vmem:[#allocation8 + $0x90] sm:$0xff]
        %v582 = vld [vmem:[#allocation8 + $0x98] sm:$0xff]
        %v583 = vld [vmem:[#allocation8 + $0xa0] sm:$0xff]
        %v584 = vld [vmem:[#allocation8 + $0xa8] sm:$0xff]
        %v585 = vld [vmem:[#allocation8 + $0xb0] sm:$0xff]
        %v586 = vld [vmem:[#allocation8 + $0xb8] sm:$0xff]
        %v587 = vld [vmem:[#allocation8 + $0xc0] sm:$0xff]
        %v588 = vld [vmem:[#allocation8 + $0xc8] sm:$0xff]
        %v589 = vld [vmem:[#allocation8 + $0xd0] sm:$0xff]
        %v590 = vld [vmem:[#allocation8 + $0xd8] sm:$0xff]
        %v591 = vld [vmem:[#allocation8 + $0xe0] sm:$0xff]
        %v592 = vld [vmem:[#allocation8 + $0xe8] sm:$0xff]
        %v593 = vld [vmem:[#allocation8 + $0xf0] sm:$0xff]
        %v594 = vld [vmem:[#allocation8 + $0xf8] sm:$0xff]
        %v595 = vld [vmem:[%s358] sm:$0x1]
        %v597 = vlaneseq
        %v598 = vshrl.u32 %v597, 7
        %v599 = vsub.s32 0, %v598
        %v600 = vrot.slane %v595, %v599
        %602 = vmatprep.subr.mxu0 0.0
        %603 = vmatpush1.msra.mxu0 %v563
        %604 = vmatprep.subr.mxu0 0.0
        %605 = vmatpush1.msra.mxu0 %v564
        %606 = vmatprep.subr.mxu0 0.0
        %607 = vmatpush1.msra.mxu0 %v565
        %608 = vmatprep.subr.mxu0 0.0
        %609 = vmatpush1.msra.mxu0 %v566
        %610 = vmatprep.subr.mxu0 0.0
        %611 = vmatpush1.msra.mxu0 %v567
        %612 = vmatprep.subr.mxu0 0.0
        %613 = vmatpush1.msra.mxu0 %v568
        %614 = vmatprep.subr.mxu0 0.0
        %615 = vmatpush1.msra.mxu0 %v569
        %616 = vmatprep.subr.mxu0 0.0
        %617 = vmatpush1.msra.mxu0 %v570
        %618 = vmatprep.subr.mxu0 0.0
        %619 = vmatpush1.msra.mxu0 %v571
        %620 = vmatprep.subr.mxu0 0.0
        %621 = vmatpush1.msra.mxu0 %v572
        %622 = vmatprep.subr.mxu0 0.0
        %623 = vmatpush1.msra.mxu0 %v573
        %624 = vmatprep.subr.mxu0 0.0
        %625 = vmatpush1.msra.mxu0 %v574
        %626 = vmatprep.subr.mxu0 0.0
        %627 = vmatpush1.msra.mxu0 %v575
        %628 = vmatprep.subr.mxu0 0.0
        %629 = vmatpush1.msra.mxu0 %v576
        %630 = vmatprep.subr.mxu0 0.0
        %631 = vmatpush1.msra.mxu0 %v577
        %632 = vmatprep.subr.mxu0 0.0
        %633 = vmatpush1.msra.mxu0 %v578
        %634 = vmatprep.subr.mxu0 0.0
        %635 = vmatpush1.msra.mxu0 %v579
        %636 = vmatprep.subr.mxu0 0.0
        %637 = vmatpush1.msra.mxu0 %v580
        %638 = vmatprep.subr.mxu0 0.0
        %639 = vmatpush1.msra.mxu0 %v581
        %640 = vmatprep.subr.mxu0 0.0
        %641 = vmatpush1.msra.mxu0 %v582
        %642 = vmatprep.subr.mxu0 0.0
        %643 = vmatpush1.msra.mxu0 %v583
        %644 = vmatprep.subr.mxu0 0.0
        %645 = vmatpush1.msra.mxu0 %v584
        %646 = vmatprep.subr.mxu0 0.0
        %647 = vmatpush1.msra.mxu0 %v585
        %648 = vmatprep.subr.mxu0 0.0
        %649 = vmatpush1.msra.mxu0 %v586
        %650 = vmatprep.subr.mxu0 0.0
        %651 = vmatpush1.msra.mxu0 %v587
        %652 = vmatprep.subr.mxu0 0.0
        %653 = vmatpush1.msra.mxu0 %v588
        %654 = vmatprep.subr.mxu0 0.0
        %655 = vmatpush1.msra.mxu0 %v589
        %656 = vmatprep.subr.mxu0 0.0
        %657 = vmatpush1.msra.mxu0 %v590
        %658 = vmatprep.subr.mxu0 0.0
        %659 = vmatpush1.msra.mxu0 %v591
        %660 = vmatprep.subr.mxu0 0.0
        %661 = vmatpush1.msra.mxu0 %v592
        %662 = vmatprep.subr.mxu0 0.0
        %663 = vmatpush1.msra.mxu0 %v593
        %664 = vmatprep.subr.mxu0 0.0
        %665 = vmatpush1.msra.mxu0 %v594
        %666 = vmatprep.mubr.f32.mxu0 %v562
        %667 = vmatmul.mubr.f32.gmra.mrb[0].mxu0 %v561
        %v668 = vpop.f32.mrb[0].mxu0
        %v669 = vadd.f32 %v600, %v668
        %v670 = vpop.f32.mrb[0].mxu0
        %671 = vdwg.mxu0
        %672 = vst [vmem:[%s355] sm:$0xff] %v669
        %s673 = sand.u32 %s209, 1
        %s674 = scalar_lea.sflag [#allocation5], %s673
        %s675 = sand.u32 %s209, 1
        %s676 = smul.addr %s675, 8
        %s677 = scalar_lea.vmem [#allocation9], %s676
        // Predicated region
        $region65: #{tpu_custom_call.1} parent=47 // pred_check
          %p678 = pneg %p219
        $region66: #{tpu_custom_call.1} parent=47 // pred_check_branch
          %680 = sbr.rel (%p678) target = $region68
        $region67: #{tpu_custom_call.1} parent=47 // pred_region
          %s682 = ssub.s32 128, 128
          %683 = vsyncadd %s674, %s682
          %s684 = sadd.s32 %s30, %s29
          %s685 = smul.addr %s684, 128
          %s686 = scalar_lea.hbm %s7, %s685
          %s688 = sshll.u32 %s677, 4
          %s689 = int_to_ptr.vmem [resolvable:$true] %s688
          %691 = dma.vmem_to_hbm [thread:$0]  %s689, 128, %s686, %s674
        $region68: #{tpu_custom_call.1} parent=47 // pred_fallthru
          _
      $region48: #{tpu_custom_call.1} parent=5 // pred_fallthru
        _
      %p692 = scmp.le.s32.totalorder 2, %s20
      // Predicated region
      $region69: #{tpu_custom_call.1} parent=5 // pred_check
        %p693 = pneg %p692
      $region70: #{tpu_custom_call.1} parent=5 // pred_check_branch
        %695 = sbr.rel (%p693) target = $region72
      $region71: #{tpu_custom_call.1} parent=5 // pred_region
        %s696 = ssub.s32 %s20, 2
        // Predicated region
        $region73: #{tpu_custom_call.1} parent=71 // pred_check
          %p697 = pneg %p225
        $region74: #{tpu_custom_call.1} parent=71 // pred_check_branch
          %699 = sbr.rel (%p697) target = $region76
        $region75: #{tpu_custom_call.1} parent=71 // pred_region
          %s700 = sand.u32 %s210, 1
          %s701 = scalar_lea.sflag [#allocation5], %s700
          %s702 = sand.u32 %s210, 1
          %s703 = smul.addr %s702, 8
          %s704 = scalar_lea.vmem [#allocation9], %s703
          %705 = dma.done %s701, 128
        $region76: #{tpu_custom_call.1} parent=71 // pred_fallthru
          _
      $region72: #{tpu_custom_call.1} parent=5 // pred_fallthru
        _
    $region6: #{tpu_custom_call.1} parent=1 // loop_footer
      %s24 = sadd.s32 1, %s20
    $region7: #{tpu_custom_call.1} parent=1 // loop_footer_branch
      %19 = sbr.rel target = $region3
    $region8: #{tpu_custom_call.1} parent=1 // loop_exit
      _
    %706 = vsyncpa [#allocation4], 1
    %s707 = scalar_lea.sflag [#allocation4], 1
    %708 = vsyncpa %s707, 1
    %709 = vsyncpa [#allocation7], 1
    %710 = vsyncpa [#allocation5], 1
    %s711 = scalar_lea.sflag [#allocation5], 1
    %712 = vsyncpa %s711, 1

// kernel: tpu_custom_call.1
$region0: #{tpu_custom_call.1}
  #allocation0 [shape = 'u32[]', space=smem, size = 0x4, offset = 0x4, fixed_abs, tag = 'smem constant byte address 0x4 - core index']
  #allocation1 [shape = 'u32[144,128]{1,0:T(1,128)}', space=vmem, size = 0x12000, scoped, tag = 'internal scratch']
  #allocation2 [shape = 'f32[8,256]{1,0:T(8,128)}', space=vmem, size = 0x2000, scoped, tag = 'scratch operand']
  %s0 = inlined_call_operand.hbm [shape: f32[16,256], index: 0, kind: input, shape index: {}]
  %s1 = inlined_call_operand.hbm [shape: f32[256,256], index: 1, kind: input, shape index: {}]
  %s2 = inlined_call_operand.vmem [shape: f32[1,256], index: 2, kind: input, shape index: {}]
  %s3 = inlined_call_operand.vmem [shape: f32[1,256], index: 3, kind: input, shape index: {}]
  %s4 = inlined_call_operand.vmem [shape: f32[1,256], index: 4, kind: input, shape index: {}]
  %s5 = inlined_call_operand.hbm [shape: f32[256,128], index: 5, kind: input, shape index: {}]
  %s6 = inlined_call_operand.vmem [shape: f32[1,128], index: 6, kind: input, shape index: {}]
  %s7 = inlined_call_operand.hbm [shape: f32[16,128], index: 7, kind: output, shape index: {}]
  %s8 = sld [smem:[#allocation0]]
  $region77: #{tpu_custom_call.1} parent=0
    _
  %s10 = ssub.s32 1, %s8
  %s11 = scalar_select 0, %s10, %s8
  $region1: #{tpu_custom_call.1} parent=0
    #allocation3 [shape = 'u8[16384]{0}', space=vmem, size = 0x4000, scoped, tag = 'input window, operand 0']
    #allocation4 [shape = 's32[2]{0}', space=sflag, size = 0x8, scoped, tag = 'scoped memory for tpu_custom_call.1']
    #allocation5 [shape = 's32[2]{0}', space=sflag, size = 0x8, scoped, tag = 'scoped memory for tpu_custom_call.1']
    #allocation6 [shape = 'u8[262144]{0}', space=vmem, size = 0x40000, scoped, tag = 'input window, operand 1, single buffered']
    #allocation7 [shape = 's32[1]{0}', space=sflag, size = 0x4, scoped, tag = 'scoped memory for tpu_custom_call.1']
    #allocation8 [shape = 'u8[131072]{0}', space=vmem, size = 0x20000, scoped, tag = 'input window, operand 5, single buffered']
    #allocation9 [shape = 'u8[8192]{0}', space=vmem, size = 0x2000, scoped, tag = 'output window, operand 0']
    %12 = vsyncpa [#allocation4], 0
    %s13 = scalar_lea.sflag [#allocation4], 1
    %14 = vsyncpa %s13, 0
    %15 = vsyncpa [#allocation7], 0
    %16 = vsyncpa [#allocation5], 0
    %s17 = scalar_lea.sflag [#allocation5], 1
    %18 = vsyncpa %s17, 0
    loop: start=0, step=1, limit=4
    $region2: #{tpu_custom_call.1} parent=1 // loop_pre_header
      _
    $region3: #{tpu_custom_call.1} parent=1 // loop_header
      %s20 = sphi 0, %s24
      %p21 = scmp.ge.s32.totalorder %s20, 4
      %s27 = sphi 0, %s39
      %s28 = sphi 0, %s35
      %s29 = sphi 0, %s27
      %s30 = sphi 0, %s28
      %s31 = sphi 0, %s29
      %s32 = sphi 0, %s30
      %s42 = sphi 0, %s44
      %s45 = sphi 0, %s42
      %s46 = sphi 0, %s45
      %s62 = sphi 0, %s46
      %s66 = sphi 0, %s66
      %s68 = sphi 0, %s66
      %s69 = sphi 0, %s68
      %s83 = sphi 0, %s69
      %s87 = sphi 0, %s87
      %s89 = sphi 0, %s87
      %s90 = sphi 0, %s89
      %s104 = sphi 0, %s90
      %s108 = sphi 0, %s108
      %s110 = sphi 0, %s108
      %s111 = sphi 0, %s110
      %s125 = sphi 0, %s111
      %s129 = sphi 0, %s129
      %s131 = sphi 0, %s129
      %s132 = sphi 0, %s131
      %s146 = sphi 0, %s132
      %s152 = sphi 0, %s154
      %s155 = sphi 0, %s152
      %s156 = sphi 0, %s155
      %s172 = sphi 0, %s156
      %s178 = sphi 0, %s180
      %s181 = sphi 0, %s178
      %s182 = sphi 0, %s181
      %s198 = sphi 0, %s182
      %s206 = sphi 0, %s208
      %s209 = sphi 0, %s206
      %s210 = sphi 0, %s209
      %s226 = sphi 0, %s210
    $region4: #{tpu_custom_call.1} parent=1 // loop_header_branch
      %23 = sbr.rel (%p21) target = $region8
    $region5: #{tpu_custom_call.1} parent=1 // loop_body
      %s25 = ssub.s32 %s20, 1
      %s26 = ssub.s32 %s20, 2
      %s33 = sadd.s32 1, %s28
      %p34 = scmp.ge.s32.totalorder %s33, 1
      %s35 = scalar_select %p34, 0, %s33
      %s36 = sadd.s32 1, %s27
      %s37 = scalar_select %p34, %s36, %s27
      %p38 = scmp.ge.s32.totalorder %s37, 2
      %s39 = scalar_select %p38, 0, %s37
      %s40 = ssub.s32 %s27, %s39
      %p41 = scmp.eq.s32.totalorder %s40, 0
      %s43 = sadd.s32 %s42, 1
      %s44 = scalar_select %p41, %s42, %s43
      %p47 = pneg %p41
      %p48 = scmp.eq.s32.totalorder %s20, 1
      %p49 = por %p47, %p48
      %p50 = scmp.ne.s32.totalorder %s42, %s45
      %p51 = scmp.eq.s32.totalorder %s20, 0
      %p52 = por %p50, %p51
      %p53 = scmp.ne.s32.totalorder %s42, %s45
      %p54 = scmp.eq.s32.totalorder %s25, 1
      %p55 = por %p53, %p54
      %p56 = scmp.ne.s32.totalorder %s45, %s46
      %p57 = scmp.eq.s32.totalorder %s25, 0
      %p58 = por %p56, %p57
      %p59 = scmp.ne.s32.totalorder %s45, %s46
      %p60 = scmp.eq.s32.totalorder %s26, 1
      %p61 = por %p59, %p60
      %p63 = scmp.ne.s32.totalorder %s46, %s62
      %p64 = scmp.eq.s32.totalorder %s26, 0
      %p65 = por %p63, %p64
      %s67 = sadd.s32 %s66, 1
      %p70 = scmp.eq.s32.totalorder %s20, 1
      %p71 = scmp.ne.s32.totalorder %s66, %s68
      %p72 = scmp.eq.s32.totalorder %s20, 0
      %p73 = por %p71, %p72
      %p74 = scmp.ne.s32.totalorder %s66, %s68
      %p75 = scmp.eq.s32.totalorder %s25, 1
      %p76 = por %p74, %p75
      %p77 = scmp.ne.s32.totalorder %s68, %s69
      %p78 = scmp.eq.s32.totalorder %s25, 0
      %p79 = por %p77, %p78
      %p80 = scmp.ne.s32.totalorder %s68, %s69
      %p81 = scmp.eq.s32.totalorder %s26, 1
      %p82 = por %p80, %p81
      %p84 = scmp.ne.s32.totalorder %s69, %s83
      %p85 = scmp.eq.s32.totalorder %s26, 0
      %p86 = por %p84, %p85
      %s88 = sadd.s32 %s87, 1
      %p91 = scmp.eq.s32.totalorder %s20, 1
      %p92 = scmp.ne.s32.totalorder %s87, %s89
      %p93 = scmp.eq.s32.totalorder %s20, 0
      %p94 = por %p92, %p93
      %p95 = scmp.ne.s32.totalorder %s87, %s89
      %p96 = scmp.eq.s32.totalorder %s25, 1
      %p97 = por %p95, %p96
      %p98 = scmp.ne.s32.totalorder %s89, %s90
      %p99 = scmp.eq.s32.totalorder %s25, 0
      %p100 = por %p98, %p99
      %p101 = scmp.ne.s32.totalorder %s89, %s90
      %p102 = scmp.eq.s32.totalorder %s26, 1
      %p103 = por %p101, %p102
      %p105 = scmp.ne.s32.totalorder %s90, %s104
      %p106 = scmp.eq.s32.totalorder %s26, 0
      %p107 = por %p105, %p106
      %s109 = sadd.s32 %s108, 1
      %p112 = scmp.eq.s32.totalorder %s20, 1
      %p113 = scmp.ne.s32.totalorder %s108, %s110
      %p114 = scmp.eq.s32.totalorder %s20, 0
      %p115 = por %p113, %p114
      %p116 = scmp.ne.s32.totalorder %s108, %s110
      %p117 = scmp.eq.s32.totalorder %s25, 1
      %p118 = por %p116, %p117
      %p119 = scmp.ne.s32.totalorder %s110, %s111
      %p120 = scmp.eq.s32.totalorder %s25, 0
      %p121 = por %p119, %p120
      %p122 = scmp.ne.s32.totalorder %s110, %s111
      %p123 = scmp.eq.s32.totalorder %s26, 1
      %p124 = por %p122, %p123
      %p126 = scmp.ne.s32.totalorder %s111, %s125
      %p127 = scmp.eq.s32.totalorder %s26, 0
      %p128 = por %p126, %p127
      %s130 = sadd.s32 %s129, 1
      %p133 = scmp.eq.s32.totalorder %s20, 1
      %p134 = scmp.ne.s32.totalorder %s129, %s131
      %p135 = scmp.eq.s32.totalorder %s20, 0
      %p136 = por %p134, %p135
      %p137 = scmp.ne.s32.totalorder %s129, %s131
      %p138 = scmp.eq.s32.totalorder %s25, 1
      %p139 = por %p137, %p138
      %p140 = scmp.ne.s32.totalorder %s131, %s132
      %p141 = scmp.eq.s32.totalorder %s25, 0
      %p142 = por %p140, %p141
      %p143 = scmp.ne.s32.totalorder %s131, %s132
      %p144 = scmp.eq.s32.totalorder %s26, 1
      %p145 = por %p143, %p144
      %p147 = scmp.ne.s32.totalorder %s132, %s146
      %p148 = scmp.eq.s32.totalorder %s26, 0
      %p149 = por %p147, %p148
      %s150 = ssub.s32 %s28, %s35
      %p151 = scmp.eq.s32.totalorder %s150, 0
      %s153 = sadd.s32 %s152, 1
      %s154 = scalar_select %p151, %s152, %s153
      %p157 = pneg %p151
      %p158 = scmp.eq.s32.totalorder %s20, 1
      %p159 = por %p157, %p158
      %p160 = scmp.ne.s32.totalorder %s152, %s155
      %p161 = scmp.eq.s32.totalorder %s20, 0
      %p162 = por %p160, %p161
      %p163 = scmp.ne.s32.totalorder %s152, %s155
      %p164 = scmp.eq.s32.totalorder %s25, 1
      %p165 = por %p163, %p164
      %p166 = scmp.ne.s32.totalorder %s155, %s156
      %p167 = scmp.eq.s32.totalorder %s25, 0
      %p168 = por %p166, %p167
      %p169 = scmp.ne.s32.totalorder %s155, %s156
      %p170 = scmp.eq.s32.totalorder %s26, 1
      %p171 = por %p169, %p170
      %p173 = scmp.ne.s32.totalorder %s156, %s172
      %p174 = scmp.eq.s32.totalorder %s26, 0
      %p175 = por %p173, %p174
      %s176 = ssub.s32 %s28, %s35
      %p177 = scmp.eq.s32.totalorder %s176, 0
      %s179 = sadd.s32 %s178, 1
      %s180 = scalar_select %p177, %s178, %s179
      %p183 = pneg %p177
      %p184 = scmp.eq.s32.totalorder %s20, 1
      %p185 = por %p183, %p184
      %p186 = scmp.ne.s32.totalorder %s178, %s181
      %p187 = scmp.eq.s32.totalorder %s20, 0
      %p188 = por %p186, %p187
      %p189 = scmp.ne.s32.totalorder %s178, %s181
      %p190 = scmp.eq.s32.totalorder %s25, 1
      %p191 = por %p189, %p190
      %p192 = scmp.ne.s32.totalorder %s181, %s182
      %p193 = scmp.eq.s32.totalorder %s25, 0
      %p194 = por %p192, %p193
      %p195 = scmp.ne.s32.totalorder %s181, %s182
      %p196 = scmp.eq.s32.totalorder %s26, 1
      %p197 = por %p195, %p196
      %p199 = scmp.ne.s32.totalorder %s182, %s198
      %p200 = scmp.eq.s32.totalorder %s26, 0
      %p201 = por %p199, %p200
      %s202 = ssub.s32 %s27, %s39
      %s203 = ssub.s32 %s28, %s35
      %s204 = sor.u32 %s202, %s203
      %p205 = scmp.eq.s32.totalorder %s204, 0
      %s207 = sadd.s32 %s206, 1
      %s208 = scalar_select %p205, %s206, %s207
      %p211 = pneg %p205
      %p212 = scmp.eq.s32.totalorder %s20, 1
      %p213 = por %p211, %p212
      %p214 = scmp.ne.s32.totalorder %s206, %s209
      %p215 = scmp.eq.s32.totalorder %s20, 0
      %p216 = por %p214, %p215
      %p217 = scmp.ne.s32.totalorder %s206, %s209
      %p218 = scmp.eq.s32.totalorder %s25, 1
      %p219 = por %p217, %p218
      %p220 = scmp.ne.s32.totalorder %s209, %s210
      %p221 = scmp.eq.s32.totalorder %s25, 0
      %p222 = por %p220, %p221
      %p223 = scmp.ne.s32.totalorder %s209, %s210
      %p224 = scmp.eq.s32.totalorder %s26, 1
      %p225 = por %p223, %p224
      %p227 = scmp.ne.s32.totalorder %s210, %s226
      %p228 = scmp.eq.s32.totalorder %s26, 0
      %p229 = por %p227, %p228
      %p230 = scmp.le.s32.totalorder 1, %s20
      %p231 = scmp.lt.s32.totalorder %s20, 3
      %p232 = pnand %p230, %p231
      %p233 = pneg %p232
      // Predicated region
      $region9: #{tpu_custom_call.1} parent=5 // pred_check
        _
      $region10: #{tpu_custom_call.1} parent=5 // pred_check_branch
        %235 = sbr.rel (%p232) target = $region12
      $region11: #{tpu_custom_call.1} parent=5 // pred_region
        %s236 = ssub.s32 %s20, 1
        // Predicated region
        $region13: #{tpu_custom_call.1} parent=11 // pred_check
          %p237 = pneg %p79
        $region14: #{tpu_custom_call.1} parent=11 // pred_check_branch
          %239 = sbr.rel (%p237) target = $region16
        $region15: #{tpu_custom_call.1} parent=11 // pred_region
          %s241 = ssub.s32 8192, 8192
          %242 = vsyncadd [#allocation7], %s241
          %s243 = sshll.u32 [#allocation6], 4
          %s244 = int_to_ptr.vmem [resolvable:$true] %s243
          %249 = dma.hbm_to_vmem [thread:$0]  %s1, 8192, %s244, [#allocation7], 256, 256, 16
        $region16: #{tpu_custom_call.1} parent=11 // pred_fallthru
          _
        // Predicated region
        $region17: #{tpu_custom_call.1} parent=11 // pred_check
          %p250 = pneg %p100
        $region18: #{tpu_custom_call.1} parent=11 // pred_check_branch
          %252 = sbr.rel (%p250) target = $region20
        $region19: #{tpu_custom_call.1} parent=11 // pred_region
          _
        $region20: #{tpu_custom_call.1} parent=11 // pred_fallthru
          _
        // Predicated region
        $region21: #{tpu_custom_call.1} parent=11 // pred_check
          %p253 = pneg %p121
        $region22: #{tpu_custom_call.1} parent=11 // pred_check_branch
          %255 = sbr.rel (%p253) target = $region24
        $region23: #{tpu_custom_call.1} parent=11 // pred_region
          _
        $region24: #{tpu_custom_call.1} parent=11 // pred_fallthru
          _
        // Predicated region
        $region25: #{tpu_custom_call.1} parent=11 // pred_check
          %p256 = pneg %p142
        $region26: #{tpu_custom_call.1} parent=11 // pred_check_branch
          %258 = sbr.rel (%p256) target = $region28
        $region27: #{tpu_custom_call.1} parent=11 // pred_region
          _
        $region28: #{tpu_custom_call.1} parent=11 // pred_fallthru
          _
        // Predicated region
        $region29: #{tpu_custom_call.1} parent=11 // pred_check
          %p259 = pneg %p168
        $region30: #{tpu_custom_call.1} parent=11 // pred_check_branch
          %261 = sbr.rel (%p259) target = $region32
        $region31: #{tpu_custom_call.1} parent=11 // pred_region
          %s263 = ssub.s32 4096, 4096
          %264 = vsyncadd [#allocation7], %s263
          %s265 = smul.addr %s30, 128
          %s266 = scalar_lea.hbm %s5, %s265
          %s267 = sshll.u32 [#allocation8], 4
          %s268 = int_to_ptr.vmem [resolvable:$true] %s267
          %273 = dma.hbm_to_vmem [thread:$0]  %s266, 4096, %s268, [#allocation7], 128, 128, 8
        $region32: #{tpu_custom_call.1} parent=11 // pred_fallthru
          _
        // Predicated region
        $region33: #{tpu_custom_call.1} parent=11 // pred_check
          %p274 = pneg %p194
        $region34: #{tpu_custom_call.1} parent=11 // pred_check_branch
          %276 = sbr.rel (%p274) target = $region36
        $region35: #{tpu_custom_call.1} parent=11 // pred_region
          %p277 = scmp.lt.s32.totalorder %s30, 0
          %s278 = scalar_select %p277, %s30, 0
          %s279 = scalar_lea.vmem %s6, %s278
        $region36: #{tpu_custom_call.1} parent=11 // pred_fallthru
          _
      $region12: #{tpu_custom_call.1} parent=5 // pred_fallthru
        _
      %p280 = scmp.lt.s32.totalorder %s20, 2
      // Predicated region
      $region37: #{tpu_custom_call.1} parent=5 // pred_check
        %p281 = pneg %p280
      $region38: #{tpu_custom_call.1} parent=5 // pred_check_branch
        %283 = sbr.rel (%p281) target = $region40
      $region39: #{tpu_custom_call.1} parent=5 // pred_region
        // Predicated region
        $region41: #{tpu_custom_call.1} parent=39 // pred_check
          %p284 = pneg %p52
        $region42: #{tpu_custom_call.1} parent=39 // pred_check_branch
          %286 = sbr.rel (%p284) target = $region44
        $region43: #{tpu_custom_call.1} parent=39 // pred_region
          %s287 = sand.u32 %s42, 1
          %s288 = scalar_lea.sflag [#allocation4], %s287
          %s289 = sand.u32 %s42, 1
          %s290 = smul.addr %s289, 16
          %s291 = scalar_lea.vmem [#allocation3], %s290
          %s293 = ssub.s32 256, 256
          %294 = vsyncadd %s288, %s293
          %s295 = smul.addr %s27, 2
          %s296 = smul.addr %s295, 128
          %s297 = scalar_lea.hbm %s0, %s296
          %s299 = sshll.u32 %s291, 4
          %s300 = int_to_ptr.vmem [resolvable:$true] %s299
          %302 = dma.hbm_to_vmem [thread:$0]  %s297, 256, %s300, %s288
        $region44: #{tpu_custom_call.1} parent=39 // pred_fallthru
          _
      $region40: #{tpu_custom_call.1} parent=5 // pred_fallthru
        _
      %p303 = scmp.le.s32.totalorder 1, %s20
      %p304 = scmp.lt.s32.totalorder %s20, 3
      %p305 = pnand %p303, %p304
      %p306 = pneg %p305
      // Predicated region
      $region45: #{tpu_custom_call.1} parent=5 // pred_check
        _
      $region46: #{tpu_custom_call.1} parent=5 // pred_check_branch
        %308 = sbr.rel (%p305) target = $region48
      $region47: #{tpu_custom_call.1} parent=5 // pred_region
        %s309 = ssub.s32 %s20, 1
        %s310 = sand.u32 %s45, 1
        %s311 = scalar_lea.sflag [#allocation4], %s310
        %s312 = sand.u32 %s45, 1
        %s313 = smul.addr %s312, 16
        %s314 = scalar_lea.vmem [#allocation3], %s313
        // Predicated region
        $region49: #{tpu_custom_call.1} parent=47 // pred_check
          %p315 = pneg %p58
        $region50: #{tpu_custom_call.1} parent=47 // pred_check_branch
          %317 = sbr.rel (%p315) target = $region52
        $region51: #{tpu_custom_call.1} parent=47 // pred_region
          %318 = dma.done %s311, 256
        $region52: #{tpu_custom_call.1} parent=47 // pred_fallthru
          _
        // Predicated region
        $region53: #{tpu_custom_call.1} parent=47 // pred_check
          %p319 = pneg %p79
        $region54: #{tpu_custom_call.1} parent=47 // pred_check_branch
          %321 = sbr.rel (%p319) target = $region56
        $region55: #{tpu_custom_call.1} parent=47 // pred_region
          %322 = dma.done [#allocation7], 8192
        $region56: #{tpu_custom_call.1} parent=47 // pred_fallthru
          _
        // Predicated region
        $region57: #{tpu_custom_call.1} parent=47 // pred_check
          %p323 = pneg %p168
        $region58: #{tpu_custom_call.1} parent=47 // pred_check_branch
          %325 = sbr.rel (%p323) target = $region60
        $region59: #{tpu_custom_call.1} parent=47 // pred_region
          %326 = dma.done [#allocation7], 4096
        $region60: #{tpu_custom_call.1} parent=47 // pred_fallthru
          _
        %s327 = sand.u32 %s45, 1
        %s328 = scalar_lea.sflag [#allocation4], %s327
        %s329 = sand.u32 %s45, 1
        %s330 = smul.addr %s329, 16
        %s331 = scalar_lea.vmem [#allocation3], %s330
        %p332 = pneg %p58
        %p333 = pneg %p55
        %p334 = pneg %p79
        %p335 = pneg %p76
        %p336 = pneg %p100
        %p337 = pneg %p97
        %p338 = pneg %p121
        %p339 = pneg %p118
        %p340 = pneg %p142
        %p341 = pneg %p139
        %p342 = pneg %p168
        %p343 = pneg %p165
        %p344 = scmp.lt.s32.totalorder %s30, 0
        %s345 = scalar_select %p344, %s30, 0
        %s346 = scalar_lea.vmem %s6, %s345
        %p347 = pneg %p194
        %p348 = pneg %p191
        %p349 = pneg %p222
        %p350 = pneg %p219
        %s351 = sand.u32 %s209, 1
        %s352 = scalar_lea.sflag [#allocation5], %s351
        %s353 = sand.u32 %s209, 1
        %s354 = smul.addr %s353, 8
        %s355 = scalar_lea.vmem [#allocation9], %s354
        %p356 = scmp.lt.s32.totalorder %s30, 0
        %s357 = scalar_select %p356, %s30, 0
        %s358 = scalar_lea.vmem %s6, %s357
        %p359 = scmp.eq.s32.totalorder %s30, 0
        // Predicated region
        $region61: #{tpu_custom_call.1} parent=47 // pred_check
          %p360 = pneg %p359
        $region62: #{tpu_custom_call.1} parent=47 // pred_check_branch
          %362 = sbr.rel (%p360) target = $region64
        $region63: #{tpu_custom_call.1} parent=47 // pred_region
          %v363 = vld [vmem:[%s314] sm:$0xff]
          %v364 = vld [vmem:[%s314 + $0x8] sm:$0xff]
          %v365 = vld [vmem:[#allocation6] sm:$0xff]
          %v366 = vld [vmem:[#allocation6 + $0x8] sm:$0xff]
          %v367 = vld [vmem:[#allocation6 + $0x10] sm:$0xff]
          %v368 = vld [vmem:[#allocation6 + $0x18] sm:$0xff]
          %v369 = vld [vmem:[#allocation6 + $0x20] sm:$0xff]
          %v370 = vld [vmem:[#allocation6 + $0x28] sm:$0xff]
          %v371 = vld [vmem:[#allocation6 + $0x30] sm:$0xff]
          %v372 = vld [vmem:[#allocation6 + $0x38] sm:$0xff]
          %v373 = vld [vmem:[#allocation6 + $0x40] sm:$0xff]
          %v374 = vld [vmem:[#allocation6 + $0x48] sm:$0xff]
          %v375 = vld [vmem:[#allocation6 + $0x50] sm:$0xff]
          %v376 = vld [vmem:[#allocation6 + $0x58] sm:$0xff]
          %v377 = vld [vmem:[#allocation6 + $0x60] sm:$0xff]
          %v378 = vld [vmem:[#allocation6 + $0x68] sm:$0xff]
          %v379 = vld [vmem:[#allocation6 + $0x70] sm:$0xff]
          %v380 = vld [vmem:[#allocation6 + $0x78] sm:$0xff]
          %v381 = vld [vmem:[#allocation6 + $0x80] sm:$0xff]
          %v382 = vld [vmem:[#allocation6 + $0x88] sm:$0xff]
          %v383 = vld [vmem:[#allocation6 + $0x90] sm:$0xff]
          %v384 = vld [vmem:[#allocation6 + $0x98] sm:$0xff]
          %v385 = vld [vmem:[#allocation6 + $0xa0] sm:$0xff]
          %v386 = vld [vmem:[#allocation6 + $0xa8] sm:$0xff]
          %v387 = vld [vmem:[#allocation6 + $0xb0] sm:$0xff]
          %v388 = vld [vmem:[#allocation6 + $0xb8] sm:$0xff]
          %v389 = vld [vmem:[#allocation6 + $0xc0] sm:$0xff]
          %v390 = vld [vmem:[#allocation6 + $0xc8] sm:$0xff]
          %v391 = vld [vmem:[#allocation6 + $0xd0] sm:$0xff]
          %v392 = vld [vmem:[#allocation6 + $0xd8] sm:$0xff]
          %v393 = vld [vmem:[#allocation6 + $0xe0] sm:$0xff]
          %v394 = vld [vmem:[#allocation6 + $0xe8] sm:$0xff]
          %v395 = vld [vmem:[#allocation6 + $0xf0] sm:$0xff]
          %v396 = vld [vmem:[#allocation6 + $0xf8] sm:$0xff]
          %v397 = vld [vmem:[#allocation6 + $0x100] sm:$0xff]
          %v398 = vld [vmem:[#allocation6 + $0x108] sm:$0xff]
          %v399 = vld [vmem:[#allocation6 + $0x110] sm:$0xff]
          %v400 = vld [vmem:[#allocation6 + $0x118] sm:$0xff]
          %v401 = vld [vmem:[#allocation6 + $0x120] sm:$0xff]
          %v402 = vld [vmem:[#allocation6 + $0x128] sm:$0xff]
          %v403 = vld [vmem:[#allocation6 + $0x130] sm:$0xff]
          %v404 = vld [vmem:[#allocation6 + $0x138] sm:$0xff]
          %v405 = vld [vmem:[#allocation6 + $0x140] sm:$0xff]
          %v406 = vld [vmem:[#allocation6 + $0x148] sm:$0xff]
          %v407 = vld [vmem:[#allocation6 + $0x150] sm:$0xff]
          %v408 = vld [vmem:[#allocation6 + $0x158] sm:$0xff]
          %v409 = vld [vmem:[#allocation6 + $0x160] sm:$0xff]
          %v410 = vld [vmem:[#allocation6 + $0x168] sm:$0xff]
          %v411 = vld [vmem:[#allocation6 + $0x170] sm:$0xff]
          %v412 = vld [vmem:[#allocation6 + $0x178] sm:$0xff]
          %v413 = vld [vmem:[#allocation6 + $0x180] sm:$0xff]
          %v414 = vld [vmem:[#allocation6 + $0x188] sm:$0xff]
          %v415 = vld [vmem:[#allocation6 + $0x190] sm:$0xff]
          %v416 = vld [vmem:[#allocation6 + $0x198] sm:$0xff]
          %v417 = vld [vmem:[#allocation6 + $0x1a0] sm:$0xff]
          %v418 = vld [vmem:[#allocation6 + $0x1a8] sm:$0xff]
          %v419 = vld [vmem:[#allocation6 + $0x1b0] sm:$0xff]
          %v420 = vld [vmem:[#allocation6 + $0x1b8] sm:$0xff]
          %v421 = vld [vmem:[#allocation6 + $0x1c0] sm:$0xff]
          %v422 = vld [vmem:[#allocation6 + $0x1c8] sm:$0xff]
          %v423 = vld [vmem:[#allocation6 + $0x1d0] sm:$0xff]
          %v424 = vld [vmem:[#allocation6 + $0x1d8] sm:$0xff]
          %v425 = vld [vmem:[#allocation6 + $0x1e0] sm:$0xff]
          %v426 = vld [vmem:[#allocation6 + $0x1e8] sm:$0xff]
          %v427 = vld [vmem:[#allocation6 + $0x1f0] sm:$0xff]
          %v428 = vld [vmem:[#allocation6 + $0x1f8] sm:$0xff]
          %v429 = vld [vmem:[%s2] sm:$0x3]
          %v431 = vlaneseq
          %v432 = vshrl.u32 %v431, 7
          %v433 = vsub.s32 0, %v432
          %v434 = vrot.slane %v429, %v433
          %v435 = vlaneseq
          %v436 = vshrl.u32 %v435, 7
          %v437 = vsub.s32 1, %v436
          %v438 = vrot.slane %v429, %v437
          %441 = vmatprep.subr.mxu0 %v366
          %442 = vmatpush1.msra.mxu0 %v365
          %443 = vmatprep.subr.mxu0 %v368
          %444 = vmatpush1.msra.mxu0 %v367
          %445 = vmatprep.subr.mxu0 %v370
          %446 = vmatpush1.msra.mxu0 %v369
          %447 = vmatprep.subr.mxu0 %v372
          %448 = vmatpush1.msra.mxu0 %v371
          %449 = vmatprep.subr.mxu0 %v374
          %450 = vmatpush1.msra.mxu0 %v373
          %451 = vmatprep.subr.mxu0 %v376
          %452 = vmatpush1.msra.mxu0 %v375
          %453 = vmatprep.subr.mxu0 %v378
          %454 = vmatpush1.msra.mxu0 %v377
          %455 = vmatprep.subr.mxu0 %v380
          %456 = vmatpush1.msra.mxu0 %v379
          %457 = vmatprep.subr.mxu0 %v382
          %458 = vmatpush1.msra.mxu0 %v381
          %459 = vmatprep.subr.mxu0 %v384
          %460 = vmatpush1.msra.mxu0 %v383
          %461 = vmatprep.subr.mxu0 %v386
          %462 = vmatpush1.msra.mxu0 %v385
          %463 = vmatprep.subr.mxu0 %v388
          %464 = vmatpush1.msra.mxu0 %v387
          %465 = vmatprep.subr.mxu0 %v390
          %466 = vmatpush1.msra.mxu0 %v389
          %467 = vmatprep.subr.mxu0 %v392
          %468 = vmatpush1.msra.mxu0 %v391
          %469 = vmatprep.subr.mxu0 %v394
          %470 = vmatpush1.msra.mxu0 %v393
          %471 = vmatprep.subr.mxu0 %v396
          %472 = vmatpush1.msra.mxu0 %v395
          %473 = vmatprep.subr.mxu0 %v398
          %474 = vmatpush1.msra.mxu0 %v397
          %475 = vmatprep.subr.mxu0 %v400
          %476 = vmatpush1.msra.mxu0 %v399
          %477 = vmatprep.subr.mxu0 %v402
          %478 = vmatpush1.msra.mxu0 %v401
          %479 = vmatprep.subr.mxu0 %v404
          %480 = vmatpush1.msra.mxu0 %v403
          %481 = vmatprep.subr.mxu0 %v406
          %482 = vmatpush1.msra.mxu0 %v405
          %483 = vmatprep.subr.mxu0 %v408
          %484 = vmatpush1.msra.mxu0 %v407
          %485 = vmatprep.subr.mxu0 %v410
          %486 = vmatpush1.msra.mxu0 %v409
          %487 = vmatprep.subr.mxu0 %v412
          %488 = vmatpush1.msra.mxu0 %v411
          %489 = vmatprep.subr.mxu0 %v414
          %490 = vmatpush1.msra.mxu0 %v413
          %491 = vmatprep.subr.mxu0 %v416
          %492 = vmatpush1.msra.mxu0 %v415
          %493 = vmatprep.subr.mxu0 %v418
          %494 = vmatpush1.msra.mxu0 %v417
          %495 = vmatprep.subr.mxu0 %v420
          %496 = vmatpush1.msra.mxu0 %v419
          %497 = vmatprep.subr.mxu0 %v422
          %498 = vmatpush1.msra.mxu0 %v421
          %499 = vmatprep.subr.mxu0 %v424
          %500 = vmatpush1.msra.mxu0 %v423
          %501 = vmatprep.subr.mxu0 %v426
          %502 = vmatpush1.msra.mxu0 %v425
          %503 = vmatprep.subr.mxu0 %v428
          %504 = vmatpush1.msra.mxu0 %v427
          %505 = vmatprep.mubr.f32.mxu0 %v364
          %506 = vmatmul.mubr.f32.gmra.mrb[0].mxu0 %v363
          %v507 = vpop.f32.mrb[0].mxu0
          %v508 = vadd.f32 %v434, %v507
          %v509 = vpop.f32.mrb[0].mxu0
          %v510 = vadd.f32 %v438, %v509
          %511 = vdwg.mxu0
          %v512 = vmax.f32 %v508, 0.0
          %v513 = vmax.f32 %v510, 0.0
          %v514 = vadd.f32 %v512, %v513
          %515 = vadd.xlane.f32.xlu0 %v514
          %v516 = vpop.xlane.xlu0 %515
          %v517 = vrcp.pop 256.0
          %v518 = vmul.f32 %v516, %v517
          %v519 = vsub.f32 %v512, %v518
          %v520 = vsub.f32 %v513, %v518
          %v521 = vmul.f32 %v519, %v519
          %v522 = vmul.f32 %v520, %v520
          %v523 = vadd.f32 %v521, %v522
          %524 = vadd.xlane.f32.xlu0 %v523
          %v525 = vpop.xlane.xlu0 %524
          %v526 = vmul.f32 %v525, %v517
          %v527 = vadd.f32 %v526, 1e-05
          %v528 = vrsqrt.pop %v527
          %v529 = vmul.f32 %v519, %v528
          %v530 = vmul.f32 %v520, %v528
          %v531 = vld [vmem:[%s3] sm:$0x3]
          %v533 = vlaneseq
          %v534 = vshrl.u32 %v533, 7
          %v535 = vsub.s32 0, %v534
          %v536 = vrot.slane %v531, %v535
          %v537 = vlaneseq
          %v538 = vshrl.u32 %v537, 7
          %v539 = vsub.s32 1, %v538
          %v540 = vrot.slane %v531, %v539
          %v543 = vmul.f32 %v529, %v536
          %v544 = vmul.f32 %v530, %v540
          %v545 = vld [vmem:[%s4] sm:$0x3]
          %v547 = vlaneseq
          %v548 = vshrl.u32 %v547, 7
          %v549 = vsub.s32 0, %v548
          %v550 = vrot.slane %v545, %v549
          %v551 = vlaneseq
          %v552 = vshrl.u32 %v551, 7
          %v553 = vsub.s32 1, %v552
          %v554 = vrot.slane %v545, %v553
          %v557 = vadd.f32 %v543, %v550
          %v558 = vadd.f32 %v544, %v554
          %559 = vst [vmem:[#allocation2] sm:$0xff] %v557
          %560 = vst [vmem:[#allocation2 + $0x8] sm:$0xff] %v558
        $region64: #{tpu_custom_call.1} parent=47 // pred_fallthru
          _
        %v561 = vld [vmem:[#allocation2] sm:$0xff]
        %v562 = vld [vmem:[#allocation2 + $0x8] sm:$0xff]
        %v563 = vld [vmem:[#allocation8] sm:$0xff]
        %v564 = vld [vmem:[#allocation8 + $0x8] sm:$0xff]
        %v565 = vld [vmem:[#allocation8 + $0x10] sm:$0xff]
        %v566 = vld [vmem:[#allocation8 + $0x18] sm:$0xff]
        %v567 = vld [vmem:[#allocation8 + $0x20] sm:$0xff]
        %v568 = vld [vmem:[#allocation8 + $0x28] sm:$0xff]
        %v569 = vld [vmem:[#allocation8 + $0x30] sm:$0xff]
        %v570 = vld [vmem:[#allocation8 + $0x38] sm:$0xff]
        %v571 = vld [vmem:[#allocation8 + $0x40] sm:$0xff]
        %v572 = vld [vmem:[#allocation8 + $0x48] sm:$0xff]
        %v573 = vld [vmem:[#allocation8 + $0x50] sm:$0xff]
        %v574 = vld [vmem:[#allocation8 + $0x58] sm:$0xff]
        %v575 = vld [vmem:[#allocation8 + $0x60] sm:$0xff]
        %v576 = vld [vmem:[#allocation8 + $0x68] sm:$0xff]
        %v577 = vld [vmem:[#allocation8 + $0x70] sm:$0xff]
        %v578 = vld [vmem:[#allocation8 + $0x78] sm:$0xff]
        %v579 = vld [vmem:[#allocation8 + $0x80] sm:$0xff]
        %v580 = vld [vmem:[#allocation8 + $0x88] sm:$0xff]
        %v581 = vld [vmem:[#allocation8 + $0x90] sm:$0xff]
        %v582 = vld [vmem:[#allocation8 + $0x98] sm:$0xff]
        %v583 = vld [vmem:[#allocation8 + $0xa0] sm:$0xff]
        %v584 = vld [vmem:[#allocation8 + $0xa8] sm:$0xff]
        %v585 = vld [vmem:[#allocation8 + $0xb0] sm:$0xff]
        %v586 = vld [vmem:[#allocation8 + $0xb8] sm:$0xff]
        %v587 = vld [vmem:[#allocation8 + $0xc0] sm:$0xff]
        %v588 = vld [vmem:[#allocation8 + $0xc8] sm:$0xff]
        %v589 = vld [vmem:[#allocation8 + $0xd0] sm:$0xff]
        %v590 = vld [vmem:[#allocation8 + $0xd8] sm:$0xff]
        %v591 = vld [vmem:[#allocation8 + $0xe0] sm:$0xff]
        %v592 = vld [vmem:[#allocation8 + $0xe8] sm:$0xff]
        %v593 = vld [vmem:[#allocation8 + $0xf0] sm:$0xff]
        %v594 = vld [vmem:[#allocation8 + $0xf8] sm:$0xff]
        %v595 = vld [vmem:[%s358] sm:$0x1]
        %v597 = vlaneseq
        %v598 = vshrl.u32 %v597, 7
        %v599 = vsub.s32 0, %v598
        %v600 = vrot.slane %v595, %v599
        %602 = vmatprep.subr.mxu0 0.0
        %603 = vmatpush1.msra.mxu0 %v563
        %604 = vmatprep.subr.mxu0 0.0
        %605 = vmatpush1.msra.mxu0 %v564
        %606 = vmatprep.subr.mxu0 0.0
        %607 = vmatpush1.msra.mxu0 %v565
        %608 = vmatprep.subr.mxu0 0.0
        %609 = vmatpush1.msra.mxu0 %v566
        %610 = vmatprep.subr.mxu0 0.0
        %611 = vmatpush1.msra.mxu0 %v567
        %612 = vmatprep.subr.mxu0 0.0
        %613 = vmatpush1.msra.mxu0 %v568
        %614 = vmatprep.subr.mxu0 0.0
        %615 = vmatpush1.msra.mxu0 %v569
        %616 = vmatprep.subr.mxu0 0.0
        %617 = vmatpush1.msra.mxu0 %v570
        %618 = vmatprep.subr.mxu0 0.0
        %619 = vmatpush1.msra.mxu0 %v571
        %620 = vmatprep.subr.mxu0 0.0
        %621 = vmatpush1.msra.mxu0 %v572
        %622 = vmatprep.subr.mxu0 0.0
        %623 = vmatpush1.msra.mxu0 %v573
        %624 = vmatprep.subr.mxu0 0.0
        %625 = vmatpush1.msra.mxu0 %v574
        %626 = vmatprep.subr.mxu0 0.0
        %627 = vmatpush1.msra.mxu0 %v575
        %628 = vmatprep.subr.mxu0 0.0
        %629 = vmatpush1.msra.mxu0 %v576
        %630 = vmatprep.subr.mxu0 0.0
        %631 = vmatpush1.msra.mxu0 %v577
        %632 = vmatprep.subr.mxu0 0.0
        %633 = vmatpush1.msra.mxu0 %v578
        %634 = vmatprep.subr.mxu0 0.0
        %635 = vmatpush1.msra.mxu0 %v579
        %636 = vmatprep.subr.mxu0 0.0
        %637 = vmatpush1.msra.mxu0 %v580
        %638 = vmatprep.subr.mxu0 0.0
        %639 = vmatpush1.msra.mxu0 %v581
        %640 = vmatprep.subr.mxu0 0.0
        %641 = vmatpush1.msra.mxu0 %v582
        %642 = vmatprep.subr.mxu0 0.0
        %643 = vmatpush1.msra.mxu0 %v583
        %644 = vmatprep.subr.mxu0 0.0
        %645 = vmatpush1.msra.mxu0 %v584
        %646 = vmatprep.subr.mxu0 0.0
        %647 = vmatpush1.msra.mxu0 %v585
        %648 = vmatprep.subr.mxu0 0.0
        %649 = vmatpush1.msra.mxu0 %v586
        %650 = vmatprep.subr.mxu0 0.0
        %651 = vmatpush1.msra.mxu0 %v587
        %652 = vmatprep.subr.mxu0 0.0
        %653 = vmatpush1.msra.mxu0 %v588
        %654 = vmatprep.subr.mxu0 0.0
        %655 = vmatpush1.msra.mxu0 %v589
        %656 = vmatprep.subr.mxu0 0.0
        %657 = vmatpush1.msra.mxu0 %v590
        %658 = vmatprep.subr.mxu0 0.0
        %659 = vmatpush1.msra.mxu0 %v591
        %660 = vmatprep.subr.mxu0 0.0
        %661 = vmatpush1.msra.mxu0 %v592
        %662 = vmatprep.subr.mxu0 0.0
        %663 = vmatpush1.msra.mxu0 %v593
        %664 = vmatprep.subr.mxu0 0.0
        %665 = vmatpush1.msra.mxu0 %v594
        %666 = vmatprep.mubr.f32.mxu0 %v562
        %667 = vmatmul.mubr.f32.gmra.mrb[0].mxu0 %v561
        %v668 = vpop.f32.mrb[0].mxu0
        %v669 = vadd.f32 %v600, %v668
        %v670 = vpop.f32.mrb[0].mxu0
        %671 = vdwg.mxu0
        %672 = vst [vmem:[%s355] sm:$0xff] %v669
        %s673 = sand.u32 %s209, 1
        %s674 = scalar_lea.sflag [#allocation5], %s673
        %s675 = sand.u32 %s209, 1
        %s676 = smul.addr %s675, 8
        %s677 = scalar_lea.vmem [#allocation9], %s676
        // Predicated region
        $region65: #{tpu_custom_call.1} parent=47 // pred_check
          %p678 = pneg %p219
        $region66: #{tpu_custom_call.1} parent=47 // pred_check_branch
          %680 = sbr.rel (%p678) target = $region68
        $region67: #{tpu_custom_call.1} parent=47 // pred_region
          %s682 = ssub.s32 128, 128
          %683 = vsyncadd %s674, %s682
          %s684 = sadd.s32 %s30, %s29
          %s685 = smul.addr %s684, 128
          %s686 = scalar_lea.hbm %s7, %s685
          %s688 = sshll.u32 %s677, 4
          %s689 = int_to_ptr.vmem [resolvable:$true] %s688
          %691 = dma.vmem_to_hbm [thread:$0]  %s689, 128, %s686, %s674
        $region68: #{tpu_custom_call.1} parent=47 // pred_fallthru
          _
      $region48: #{tpu_custom_call.1} parent=5 // pred_fallthru
        _
      %p692 = scmp.le.s32.totalorder 2, %s20
      // Predicated region
      $region69: #{tpu_custom_call.1} parent=5 // pred_check
        %p693 = pneg %p692
      $region70: #{tpu_custom_call.1} parent=5 // pred_check_branch
        %695 = sbr.rel (%p693) target = $region72
      $region71: #{tpu_custom_call.1} parent=5 // pred_region
        %s696 = ssub.s32 %s20, 2
        // Predicated region
        $region73: #{tpu_custom_call.1} parent=71 // pred_check
          %p697 = pneg %p225
        $region74: #{tpu_custom_call.1} parent=71 // pred_check_branch
          %699 = sbr.rel (%p697) target = $region76
        $region75: #{tpu_custom_call.1} parent=71 // pred_region
          %s700 = sand.u32 %s210, 1
          %s701 = scalar_lea.sflag [#allocation5], %s700
          %s702 = sand.u32 %s210, 1
          %s703 = smul.addr %s702, 8
          %s704 = scalar_lea.vmem [#allocation9], %s703
          %705 = dma.done %s701, 128
        $region76: #{tpu_custom_call.1} parent=71 // pred_fallthru
          _
      $region72: #{tpu_custom_call.1} parent=5 // pred_fallthru
        _
    $region6: #{tpu_custom_call.1} parent=1 // loop_footer
      %s24 = sadd.s32 1, %s20
    $region7: #{tpu_custom_call.1} parent=1 // loop_footer_branch
      %19 = sbr.rel target = $region3
    $region8: #{tpu_custom_call.1} parent=1 // loop_exit
      _
    %706 = vsyncpa [#allocation4], 1
    %s707 = scalar_lea.sflag [#allocation4], 1
    %708 = vsyncpa %s707, 1
    %709 = vsyncpa [#allocation7], 1
    %710 = vsyncpa [#allocation5], 1
    %s711 = scalar_lea.sflag [#allocation5], 1
    %712 = vsyncpa %s711, 1

</llo_original>
